<compile_context>
chip_gen: v7x
topology: tpu7x:2x2x1
jax: 0.10.0
libtpu: 0.0.40
codegen_flags: <defaults>
</compile_context>

<pallas_src>
import functools

import jax
import jax.numpy as jnp
from jax.experimental import pallas as pl
from jax.experimental.pallas import tpu as pltpu

D_IN = 512
D_HID = 512
D_OUT = 10
D_OUT_PAD = 128  # lane-dense padded logits width (single MXU pass; do NOT pad to 256)


def _round_up(x, m):
    return (x + m - 1) // m * m


def _pick_tile_b(B):
    """Batch tile: sublane(8)-aligned, <= 512 rows, >= 2 grid steps when B > 8.

    - cap 512: halves per-grid-step pipeline overhead vs 256 at large B while
      keeping double-buffered tiles + intermediates well under the v7x 32 MiB
      scoped-VMEM default (explicit cap, not an accident).
    - >= 2 grid steps: lets ("parallel",) megacore sharding engage on v7x.
    """
    if B <= 8:
        return 8
    half_batch = _round_up((B + 1) // 2, 8)
    return min(512, half_batch)


def _mlp_kernel(h_ref, w1_ref, b1_ref, w2_ref, b2_ref, w3_ref, b3_ref, o_ref):
    """Fused Linear->ReLU->Linear->ReLU->Linear for one batch tile.

    h / w* are bfloat16; matmuls accumulate in f32 on the MXU; biases are f32.
    (bf16 casts sit right after each ReLU: bf16 MXU operands + f32 accumulate
    is the fastest precision config on every gen, incl. v5e's no-bf16 VPU.)
    """
    x = h_ref[...]  # bf16 (tile_b, 512)

    # Linear(512, 512) + ReLU
    x = jnp.dot(x, w1_ref[...], preferred_element_type=jnp.float32) + b1_ref[...]
    x = jnp.maximum(x, 0.0).astype(jnp.bfloat16)

    # Linear(512, 512) + ReLU
    x = jnp.dot(x, w2_ref[...], preferred_element_type=jnp.float32) + b2_ref[...]
    x = jnp.maximum(x, 0.0).astype(jnp.bfloat16)

    # Linear(512, 10) padded to 128 output lanes (zero weight/bias columns)
    x = jnp.dot(x, w3_ref[...], preferred_element_type=jnp.float32) + b3_ref[...]

    o_ref[...] = x.astype(o_ref.dtype)  # (tile_b, 128), full unmasked lane-dense vst


@functools.partial(jax.jit, static_argnames=("tile_b", "out_dtype"))
def label_predictor(h, params, tile_b=None, out_dtype=jnp.float32):
    """h: (B, 512) -> logits (B, 10) in `out_dtype` (default float32)."""
    w1, b1, w2, b2, w3, b3 = params
    B = h.shape[0]

    # ---- batch tiling ----
    if tile_b is None:
        tile_b = _pick_tile_b(B)
    tile_b = max(8, _round_up(tile_b, 8))
    b_pad = _round_up(B, tile_b)
    grid = (b_pad // tile_b,)

    # ---- dtype / padding plumbing (outside the kernel) ----
    hp = h.astype(jnp.bfloat16)
    if b_pad != B:
        hp = jnp.pad(hp, ((0, b_pad - B), (0, 0)))

    w1 = w1.astype(jnp.bfloat16)
    w2 = w2.astype(jnp.bfloat16)
    w3p = jnp.pad(w3.astype(jnp.bfloat16), ((0, 0), (0, D_OUT_PAD - D_OUT)))
    b1 = b1.astype(jnp.float32).reshape(1, D_HID)
    b2 = b2.astype(jnp.float32).reshape(1, D_HID)
    b3p = jnp.pad(b3.astype(jnp.float32).reshape(1, D_OUT),
                  ((0, 0), (0, D_OUT_PAD - D_OUT)))

    # Weights/biases are grid-invariant -> load whole, single-buffered (one DMA).
    wkw = dict(pipeline_mode=pl.Buffered(1))
    in_specs = [
        pl.BlockSpec((tile_b, D_IN), lambda i: (i, 0)),            # h: default double-buffered
        pl.BlockSpec((D_IN, D_HID), lambda i: (0, 0), **wkw),
        pl.BlockSpec((1, D_HID), lambda i: (0, 0), **wkw),
        pl.BlockSpec((D_HID, D_HID), lambda i: (0, 0), **wkw),
        pl.BlockSpec((1, D_HID), lambda i: (0, 0), **wkw),
        pl.BlockSpec((D_HID, D_OUT_PAD), lambda i: (0, 0), **wkw),
        pl.BlockSpec((1, D_OUT_PAD), lambda i: (0, 0), **wkw),
    ]
    out_spec = pl.BlockSpec((tile_b, D_OUT_PAD), lambda i: (i, 0))

    out_bytes = jnp.dtype(out_dtype).itemsize
    flops = 2 * b_pad * (D_IN * D_HID + D_HID * D_HID + D_HID * D_OUT_PAD)
    bytes_accessed = (
        2 * (D_IN * D_HID + D_HID * D_HID + D_HID * D_OUT_PAD)        # bf16 weights (once)
        + 4 * (2 * D_HID + D_OUT_PAD)                                 # f32 biases
        + b_pad * (2 * D_IN + out_bytes * D_OUT_PAD)                  # bf16 in, out_dtype out
    )

    out = pl.pallas_call(
        _mlp_kernel,
        out_shape=jax.ShapeDtypeStruct((b_pad, D_OUT_PAD), out_dtype),
        grid_spec=pltpu.PrefetchScalarGridSpec(
            num_scalar_prefetch=0,
            grid=grid,
            in_specs=in_specs,
            out_specs=out_spec,
        ),
        compiler_params=pltpu.CompilerParams(
            dimension_semantics=("parallel",),
        ),
        cost_estimate=pl.CostEstimate(
            flops=flops, transcendentals=0, bytes_accessed=bytes_accessed),
    )(hp, w1, b1, w2, b2, w3p, b3p)

    # Padded batch rows / padded logit lanes are sliced off here; do not
    # consume out[:b_pad] directly.
    return out[:B, :D_OUT]


def init_params(key):
    """Deterministic init mimicking PyTorch Linear default (uniform +-1/sqrt(fan_in)).

    Weights are stored bf16 (as fed to the kernel); biases stay f32.
    """
    k1, k2, k3, k4, k5, k6 = jax.random.split(key, 6)

    def lin(kw, kb, fan_in, fan_out):
        bound = 1.0 / (fan_in ** 0.5)
        w = jax.random.uniform(kw, (fan_in, fan_out), jnp.float32, -bound, bound)
        b = jax.random.uniform(kb, (1, fan_out), jnp.float32, -bound, bound)
        return w.astype(jnp.bfloat16), b

    w1, b1 = lin(k1, k2, D_IN, D_HID)
    w2, b2 = lin(k3, k4, D_HID, D_HID)
    w3, b3 = lin(k5, k6, D_HID, D_OUT)
    return (w1, b1, w2, b2, w3, b3)


def reference(h, params):
    """Plain-JAX reference at matching (bf16 operand / f32 accumulate) precision."""
    w1, b1, w2, b2, w3, b3 = params
    x = h.astype(jnp.bfloat16)
    x = jnp.dot(x, w1.astype(jnp.bfloat16), preferred_element_type=jnp.float32) + b1
    x = jnp.maximum(x, 0.0).astype(jnp.bfloat16)
    x = jnp.dot(x, w2.astype(jnp.bfloat16), preferred_element_type=jnp.float32) + b2
    x = jnp.maximum(x, 0.0).astype(jnp.bfloat16)
    return jnp.dot(x, w3.astype(jnp.bfloat16), preferred_element_type=jnp.float32) + b3


if __name__ == "__main__":
    key = jax.random.PRNGKey(0)
    k_params, k_x, k_x2 = jax.random.split(key, 3)

    params = init_params(k_params)

    # Small-shape check (batch=2, hidden=512 as the module requires).
    B = 2
    h = jax.random.normal(k_x, (B, D_IN), jnp.float32)
    out = jax.block_until_ready(label_predictor(h, params))
    ref = jax.block_until_ready(reference(h, params))
    assert out.shape == (B, D_OUT)
    assert out.dtype == jnp.float32
    assert jnp.allclose(out, ref, atol=2e-2, rtol=2e-2), "mismatch vs reference (B=2)"

    # Exercise the multi-grid-step (>=2 steps, padded batch) path as well.
    B2 = 24
    h2 = jax.random.normal(k_x2, (B2, D_IN), jnp.float32)
    out2 = jax.block_until_ready(label_predictor(h2, params))
    ref2 = jax.block_until_ready(reference(h2, params))
    assert out2.shape == (B2, D_OUT)
    assert jnp.allclose(out2, ref2, atol=2e-2, rtol=2e-2), "mismatch vs reference (B=24)"

    print("KERNEL_OK")
</pallas_src>

<mosaic_0001>
module attributes {stable_mosaic.version = 11 : i64} {
  func.func @_mlp_kernel(%arg0: i32, %arg1: memref<8x512xbf16, #tpu.memory_space<vmem>>, %arg2: memref<512x512xbf16, #tpu.memory_space<vmem>>, %arg3: memref<1x512xf32, #tpu.memory_space<vmem>>, %arg4: memref<512x512xbf16, #tpu.memory_space<vmem>>, %arg5: memref<1x512xf32, #tpu.memory_space<vmem>>, %arg6: memref<512x128xbf16, #tpu.memory_space<vmem>>, %arg7: memref<1x128xf32, #tpu.memory_space<vmem>>, %arg8: memref<8x128xf32, #tpu.memory_space<vmem>>) attributes {dimension_semantics = [#tpu.dimension_semantics<parallel>], iteration_bounds = array<i64: 1>, scalar_prefetch = 0 : i64, scratch_operands = 0 : i64, tpu.core_type = #tpu.core_type<tc>, window_params = [{transform_indices = @transform_0, window_bounds = array<i64: 8, 512>}, {pipeline_mode = #tpu.pipeline_mode<synchronous>, transform_indices = @transform_1, window_bounds = array<i64: 512, 512>}, {pipeline_mode = #tpu.pipeline_mode<synchronous>, transform_indices = @transform_2, window_bounds = array<i64: 1, 512>}, {pipeline_mode = #tpu.pipeline_mode<synchronous>, transform_indices = @transform_3, window_bounds = array<i64: 512, 512>}, {pipeline_mode = #tpu.pipeline_mode<synchronous>, transform_indices = @transform_4, window_bounds = array<i64: 1, 512>}, {pipeline_mode = #tpu.pipeline_mode<synchronous>, transform_indices = @transform_5, window_bounds = array<i64: 512, 128>}, {pipeline_mode = #tpu.pipeline_mode<synchronous>, transform_indices = @transform_6, window_bounds = array<i64: 1, 128>}, {transform_indices = @transform_7, window_bounds = array<i64: 8, 128>}]} {
    %c0 = arith.constant 0 : index
    %c0_0 = arith.constant 0 : index
    %0 = vector.load %arg1[%c0, %c0_0] : memref<8x512xbf16, #tpu.memory_space<vmem>>, vector<8x512xbf16>
    %c0_1 = arith.constant 0 : index
    %c0_2 = arith.constant 0 : index
    %1 = vector.load %arg2[%c0_1, %c0_2] : memref<512x512xbf16, #tpu.memory_space<vmem>>, vector<512x512xbf16>
    %cst = arith.constant dense<0.000000e+00> : vector<8x512xf32>
    %2 = tpu.matmul %0, %1, %cst {dimension_numbers = #tpu.dot_dimension_numbers<[1], [0], [0], [1], [0, 0, 1, 1], [], []>} : vector<8x512xbf16>, vector<512x512xbf16>, vector<8x512xf32> -> vector<8x512xf32>
    %c0_3 = arith.constant 0 : index
    %c0_4 = arith.constant 0 : index
    %3 = vector.load %arg3[%c0_3, %c0_4] : memref<1x512xf32, #tpu.memory_space<vmem>>, vector<1x512xf32>
    %4 = vector.broadcast %3 : vector<1x512xf32> to vector<8x512xf32>
    %5 = arith.addf %2, %4 : vector<8x512xf32>
    %cst_5 = arith.constant 0.000000e+00 : f32
    %6 = vector.broadcast %cst_5 : f32 to vector<8x512xf32>
    %7 = arith.maximumf %5, %6 : vector<8x512xf32>
    %8 = arith.truncf %7 : vector<8x512xf32> to vector<8x512xbf16>
    %c0_6 = arith.constant 0 : index
    %c0_7 = arith.constant 0 : index
    %9 = vector.load %arg4[%c0_6, %c0_7] : memref<512x512xbf16, #tpu.memory_space<vmem>>, vector<512x512xbf16>
    %cst_8 = arith.constant dense<0.000000e+00> : vector<8x512xf32>
    %10 = tpu.matmul %8, %9, %cst_8 {dimension_numbers = #tpu.dot_dimension_numbers<[1], [0], [0], [1], [0, 0, 1, 1], [], []>} : vector<8x512xbf16>, vector<512x512xbf16>, vector<8x512xf32> -> vector<8x512xf32>
    %c0_9 = arith.constant 0 : index
    %c0_10 = arith.constant 0 : index
    %11 = vector.load %arg5[%c0_9, %c0_10] : memref<1x512xf32, #tpu.memory_space<vmem>>, vector<1x512xf32>
    %12 = vector.broadcast %11 : vector<1x512xf32> to vector<8x512xf32>
    %13 = arith.addf %10, %12 : vector<8x512xf32>
    %cst_11 = arith.constant 0.000000e+00 : f32
    %14 = vector.broadcast %cst_11 : f32 to vector<8x512xf32>
    %15 = arith.maximumf %13, %14 : vector<8x512xf32>
    %16 = arith.truncf %15 : vector<8x512xf32> to vector<8x512xbf16>
    %c0_12 = arith.constant 0 : index
    %c0_13 = arith.constant 0 : index
    %17 = vector.load %arg6[%c0_12, %c0_13] : memref<512x128xbf16, #tpu.memory_space<vmem>>, vector<512x128xbf16>
    %cst_14 = arith.constant dense<0.000000e+00> : vector<8x128xf32>
    %18 = tpu.matmul %16, %17, %cst_14 {dimension_numbers = #tpu.dot_dimension_numbers<[1], [0], [0], [1], [0, 0, 1, 1], [], []>} : vector<8x512xbf16>, vector<512x128xbf16>, vector<8x128xf32> -> vector<8x128xf32>
    %c0_15 = arith.constant 0 : index
    %c0_16 = arith.constant 0 : index
    %19 = vector.load %arg7[%c0_15, %c0_16] : memref<1x128xf32, #tpu.memory_space<vmem>>, vector<1x128xf32>
    %20 = vector.broadcast %19 : vector<1x128xf32> to vector<8x128xf32>
    %21 = arith.addf %18, %20 : vector<8x128xf32>
    %c0_17 = arith.constant 0 : index
    %c0_18 = arith.constant 0 : index
    %22 = vector.load %arg8[%c0_17, %c0_18] : memref<8x128xf32, #tpu.memory_space<vmem>>, vector<8x128xf32>
    tpu.vector_store %arg8[%c0_17, %c0_18], %21 {strides = array<i32>} : memref<8x128xf32, #tpu.memory_space<vmem>>, vector<8x128xf32>,
    return
  }
  func.func @transform_0(%arg0: i32) -> (i32, i32) {
    %c0_i32 = arith.constant 0 : i32
    %c0_i32_0 = arith.constant 0 : i32
    return %arg0, %c0_i32 : i32, i32
  }
  func.func @transform_1(%arg0: i32) -> (i32, i32) {
    %c0_i32 = arith.constant 0 : i32
    %c0_i32_0 = arith.constant 0 : i32
    %c0_i32_1 = arith.constant 0 : i32
    return %c0_i32, %c0_i32_0 : i32, i32
  }
  func.func @transform_2(%arg0: i32) -> (i32, i32) {
    %c0_i32 = arith.constant 0 : i32
    %c0_i32_0 = arith.constant 0 : i32
    %c0_i32_1 = arith.constant 0 : i32
    return %c0_i32, %c0_i32_0 : i32, i32
  }
  func.func @transform_3(%arg0: i32) -> (i32, i32) {
    %c0_i32 = arith.constant 0 : i32
    %c0_i32_0 = arith.constant 0 : i32
    %c0_i32_1 = arith.constant 0 : i32
    return %c0_i32, %c0_i32_0 : i32, i32
  }
  func.func @transform_4(%arg0: i32) -> (i32, i32) {
    %c0_i32 = arith.constant 0 : i32
    %c0_i32_0 = arith.constant 0 : i32
    %c0_i32_1 = arith.constant 0 : i32
    return %c0_i32, %c0_i32_0 : i32, i32
  }
  func.func @transform_5(%arg0: i32) -> (i32, i32) {
    %c0_i32 = arith.constant 0 : i32
    %c0_i32_0 = arith.constant 0 : i32
    %c0_i32_1 = arith.constant 0 : i32
    return %c0_i32, %c0_i32_0 : i32, i32
  }
  func.func @transform_6(%arg0: i32) -> (i32, i32) {
    %c0_i32 = arith.constant 0 : i32
    %c0_i32_0 = arith.constant 0 : i32
    %c0_i32_1 = arith.constant 0 : i32
    return %c0_i32, %c0_i32_0 : i32, i32
  }
  func.func @transform_7(%arg0: i32) -> (i32, i32) {
    %c0_i32 = arith.constant 0 : i32
    %c0_i32_0 = arith.constant 0 : i32
    return %arg0, %c0_i32 : i32, i32
  }
}

</mosaic_0001>

<llo_original>
// kernel: label_predictor.1
$region0: #{label_predictor.1}
  #allocation0 [shape = 'u32[]', space=smem, size = 0x4, offset = 0x4, fixed_abs, tag = 'smem constant byte address 0x4 - core index']
  #allocation1 [shape = 'u32[144,128]{1,0:T(1,128)}', space=vmem, size = 0x12000, scoped, tag = 'internal scratch']
  %s0 = inlined_call_operand.vmem [shape: bf16[8,512], index: 0, kind: input, shape index: {}]
  %s1 = inlined_call_operand.hbm [shape: bf16[512,512], index: 1, kind: input, shape index: {}]
  %s2 = inlined_call_operand.vmem [shape: f32[1,512], index: 2, kind: input, shape index: {}]
  %s3 = inlined_call_operand.hbm [shape: bf16[512,512], index: 3, kind: input, shape index: {}]
  %s4 = inlined_call_operand.vmem [shape: f32[1,512], index: 4, kind: input, shape index: {}]
  %s5 = inlined_call_operand.vmem [shape: bf16[512,128], index: 5, kind: input, shape index: {}]
  %s6 = inlined_call_operand.vmem [shape: f32[1,128], index: 6, kind: input, shape index: {}]
  %s7 = inlined_call_operand.vmem [shape: f32[8,128], index: 7, kind: output, shape index: {}]
  %s8 = sld [smem:[#allocation0]]
  $region46: #{label_predictor.1} parent=0
    _
  %s10 = ssub.s32 1, %s8
  %s11 = scalar_select 0, %s10, %s8
  $region1: #{label_predictor.1} parent=0
    #allocation2 [shape = 'u8[524288]{0}', space=vmem, size = 0x80000, scoped, tag = 'input window, operand 1, single buffered']
    #allocation3 [shape = 's32[1]{0}', space=sflag, size = 0x4, scoped, tag = 'scoped memory for label_predictor.1']
    #allocation4 [shape = 'u8[524288]{0}', space=vmem, size = 0x80000, scoped, tag = 'input window, operand 3, single buffered']
    #allocation5 [shape = 's32[1]{0}', space=sflag, size = 0x4, scoped, tag = 'scoped memory for label_predictor.1']
    %12 = vsyncpa [#allocation3], 0
    %13 = vsyncpa [#allocation5], 0
    // Predicated region
    $region2: #{label_predictor.1} parent=1 // pred_check
      _
    $region3: #{label_predictor.1} parent=1 // pred_check_branch
      %15 = sbr.rel (0) target = $region5
    $region4: #{label_predictor.1} parent=1 // pred_region
      _
    $region5: #{label_predictor.1} parent=1 // pred_fallthru
      _
    // Predicated region
    $region6: #{label_predictor.1} parent=1 // pred_check
      _
    $region7: #{label_predictor.1} parent=1 // pred_check_branch
      %17 = sbr.rel (0) target = $region9
    $region8: #{label_predictor.1} parent=1 // pred_region
      %s19 = ssub.s32 16384, 16384
      %20 = vsyncadd [#allocation3], %s19
      %s21 = sshll.u32 [#allocation2], 4
      %s22 = int_to_ptr.vmem [resolvable:$true] %s21
      %27 = dma.hbm_to_vmem [thread:$0]  %s1, 16384, %s22, [#allocation3], 256, 256, 16
    $region9: #{label_predictor.1} parent=1 // pred_fallthru
      _
    // Predicated region
    $region10: #{label_predictor.1} parent=1 // pred_check
      _
    $region11: #{label_predictor.1} parent=1 // pred_check_branch
      %29 = sbr.rel (0) target = $region13
    $region12: #{label_predictor.1} parent=1 // pred_region
      _
    $region13: #{label_predictor.1} parent=1 // pred_fallthru
      _
    // Predicated region
    $region14: #{label_predictor.1} parent=1 // pred_check
      _
    $region15: #{label_predictor.1} parent=1 // pred_check_branch
      %31 = sbr.rel (0) target = $region17
    $region16: #{label_predictor.1} parent=1 // pred_region
      %s33 = ssub.s32 16384, 16384
      %34 = vsyncadd [#allocation5], %s33
      %s35 = sshll.u32 [#allocation4], 4
      %s36 = int_to_ptr.vmem [resolvable:$true] %s35
      %41 = dma.hbm_to_vmem [thread:$0]  %s3, 16384, %s36, [#allocation5], 256, 256, 16
    $region17: #{label_predictor.1} parent=1 // pred_fallthru
      _
    // Predicated region
    $region18: #{label_predictor.1} parent=1 // pred_check
      _
    $region19: #{label_predictor.1} parent=1 // pred_check_branch
      %43 = sbr.rel (0) target = $region21
    $region20: #{label_predictor.1} parent=1 // pred_region
      _
    $region21: #{label_predictor.1} parent=1 // pred_fallthru
      _
    // Predicated region
    $region22: #{label_predictor.1} parent=1 // pred_check
      _
    $region23: #{label_predictor.1} parent=1 // pred_check_branch
      %45 = sbr.rel (0) target = $region25
    $region24: #{label_predictor.1} parent=1 // pred_region
      _
    $region25: #{label_predictor.1} parent=1 // pred_fallthru
      _
    // Predicated region
    $region26: #{label_predictor.1} parent=1 // pred_check
      _
    $region27: #{label_predictor.1} parent=1 // pred_check_branch
      %47 = sbr.rel (0) target = $region29
    $region28: #{label_predictor.1} parent=1 // pred_region
      _
    $region29: #{label_predictor.1} parent=1 // pred_fallthru
      _
    // Predicated region
    $region30: #{label_predictor.1} parent=1 // pred_check
      _
    $region31: #{label_predictor.1} parent=1 // pred_check_branch
      %49 = sbr.rel (0) target = $region33
    $region32: #{label_predictor.1} parent=1 // pred_region
      %50 = dma.done [#allocation3], 16384
    $region33: #{label_predictor.1} parent=1 // pred_fallthru
      _
    // Predicated region
    $region34: #{label_predictor.1} parent=1 // pred_check
      _
    $region35: #{label_predictor.1} parent=1 // pred_check_branch
      %52 = sbr.rel (0) target = $region37
    $region36: #{label_predictor.1} parent=1 // pred_region
      %53 = dma.done [#allocation5], 16384
    $region37: #{label_predictor.1} parent=1 // pred_fallthru
      _
    %v55 = vld [vmem:[%s0] sm:$0xff]
    %v56 = vld [vmem:[%s0 + $0x8] sm:$0xff]
    %v57 = vld [vmem:[#allocation2] sm:$0xff]
    %v58 = vld [vmem:[#allocation2 + $0x8] sm:$0xff]
    %v59 = vld [vmem:[#allocation2 + $0x10] sm:$0xff]
    %v60 = vld [vmem:[#allocation2 + $0x18] sm:$0xff]
    %v61 = vld [vmem:[#allocation2 + $0x20] sm:$0xff]
    %v62 = vld [vmem:[#allocation2 + $0x28] sm:$0xff]
    %v63 = vld [vmem:[#allocation2 + $0x30] sm:$0xff]
    %v64 = vld [vmem:[#allocation2 + $0x38] sm:$0xff]
    %v65 = vld [vmem:[#allocation2 + $0x40] sm:$0xff]
    %v66 = vld [vmem:[#allocation2 + $0x48] sm:$0xff]
    %v67 = vld [vmem:[#allocation2 + $0x50] sm:$0xff]
    %v68 = vld [vmem:[#allocation2 + $0x58] sm:$0xff]
    %v69 = vld [vmem:[#allocation2 + $0x60] sm:$0xff]
    %v70 = vld [vmem:[#allocation2 + $0x68] sm:$0xff]
    %v71 = vld [vmem:[#allocation2 + $0x70] sm:$0xff]
    %v72 = vld [vmem:[#allocation2 + $0x78] sm:$0xff]
    %v73 = vld [vmem:[#allocation2 + $0x80] sm:$0xff]
    %v74 = vld [vmem:[#allocation2 + $0x88] sm:$0xff]
    %v75 = vld [vmem:[#allocation2 + $0x90] sm:$0xff]
    %v76 = vld [vmem:[#allocation2 + $0x98] sm:$0xff]
    %v77 = vld [vmem:[#allocation2 + $0xa0] sm:$0xff]
    %v78 = vld [vmem:[#allocation2 + $0xa8] sm:$0xff]
    %v79 = vld [vmem:[#allocation2 + $0xb0] sm:$0xff]
    %v80 = vld [vmem:[#allocation2 + $0xb8] sm:$0xff]
    %v81 = vld [vmem:[#allocation2 + $0xc0] sm:$0xff]
    %v82 = vld [vmem:[#allocation2 + $0xc8] sm:$0xff]
    %v83 = vld [vmem:[#allocation2 + $0xd0] sm:$0xff]
    %v84 = vld [vmem:[#allocation2 + $0xd8] sm:$0xff]
    %v85 = vld [vmem:[#allocation2 + $0xe0] sm:$0xff]
    %v86 = vld [vmem:[#allocation2 + $0xe8] sm:$0xff]
    %v87 = vld [vmem:[#allocation2 + $0xf0] sm:$0xff]
    %v88 = vld [vmem:[#allocation2 + $0xf8] sm:$0xff]
    %v89 = vld [vmem:[#allocation2 + $0x100] sm:$0xff]
    %v90 = vld [vmem:[#allocation2 + $0x108] sm:$0xff]
    %v91 = vld [vmem:[#allocation2 + $0x110] sm:$0xff]
    %v92 = vld [vmem:[#allocation2 + $0x118] sm:$0xff]
    %v93 = vld [vmem:[#allocation2 + $0x120] sm:$0xff]
    %v94 = vld [vmem:[#allocation2 + $0x128] sm:$0xff]
    %v95 = vld [vmem:[#allocation2 + $0x130] sm:$0xff]
    %v96 = vld [vmem:[#allocation2 + $0x138] sm:$0xff]
    %v97 = vld [vmem:[#allocation2 + $0x140] sm:$0xff]
    %v98 = vld [vmem:[#allocation2 + $0x148] sm:$0xff]
    %v99 = vld [vmem:[#allocation2 + $0x150] sm:$0xff]
    %v100 = vld [vmem:[#allocation2 + $0x158] sm:$0xff]
    %v101 = vld [vmem:[#allocation2 + $0x160] sm:$0xff]
    %v102 = vld [vmem:[#allocation2 + $0x168] sm:$0xff]
    %v103 = vld [vmem:[#allocation2 + $0x170] sm:$0xff]
    %v104 = vld [vmem:[#allocation2 + $0x178] sm:$0xff]
    %v105 = vld [vmem:[#allocation2 + $0x180] sm:$0xff]
    %v106 = vld [vmem:[#allocation2 + $0x188] sm:$0xff]
    %v107 = vld [vmem:[#allocation2 + $0x190] sm:$0xff]
    %v108 = vld [vmem:[#allocation2 + $0x198] sm:$0xff]
    %v109 = vld [vmem:[#allocation2 + $0x1a0] sm:$0xff]
    %v110 = vld [vmem:[#allocation2 + $0x1a8] sm:$0xff]
    %v111 = vld [vmem:[#allocation2 + $0x1b0] sm:$0xff]
    %v112 = vld [vmem:[#allocation2 + $0x1b8] sm:$0xff]
    %v113 = vld [vmem:[#allocation2 + $0x1c0] sm:$0xff]
    %v114 = vld [vmem:[#allocation2 + $0x1c8] sm:$0xff]
    %v115 = vld [vmem:[#allocation2 + $0x1d0] sm:$0xff]
    %v116 = vld [vmem:[#allocation2 + $0x1d8] sm:$0xff]
    %v117 = vld [vmem:[#allocation2 + $0x1e0] sm:$0xff]
    %v118 = vld [vmem:[#allocation2 + $0x1e8] sm:$0xff]
    %v119 = vld [vmem:[#allocation2 + $0x1f0] sm:$0xff]
    %v120 = vld [vmem:[#allocation2 + $0x1f8] sm:$0xff]
    %v121 = vld [vmem:[#allocation2 + $0x200] sm:$0xff]
    %v122 = vld [vmem:[#allocation2 + $0x208] sm:$0xff]
    %v123 = vld [vmem:[#allocation2 + $0x210] sm:$0xff]
    %v124 = vld [vmem:[#allocation2 + $0x218] sm:$0xff]
    %v125 = vld [vmem:[#allocation2 + $0x220] sm:$0xff]
    %v126 = vld [vmem:[#allocation2 + $0x228] sm:$0xff]
    %v127 = vld [vmem:[#allocation2 + $0x230] sm:$0xff]
    %v128 = vld [vmem:[#allocation2 + $0x238] sm:$0xff]
    %v129 = vld [vmem:[#allocation2 + $0x240] sm:$0xff]
    %v130 = vld [vmem:[#allocation2 + $0x248] sm:$0xff]
    %v131 = vld [vmem:[#allocation2 + $0x250] sm:$0xff]
    %v132 = vld [vmem:[#allocation2 + $0x258] sm:$0xff]
    %v133 = vld [vmem:[#allocation2 + $0x260] sm:$0xff]
    %v134 = vld [vmem:[#allocation2 + $0x268] sm:$0xff]
    %v135 = vld [vmem:[#allocation2 + $0x270] sm:$0xff]
    %v136 = vld [vmem:[#allocation2 + $0x278] sm:$0xff]
    %v137 = vld [vmem:[#allocation2 + $0x280] sm:$0xff]
    %v138 = vld [vmem:[#allocation2 + $0x288] sm:$0xff]
    %v139 = vld [vmem:[#allocation2 + $0x290] sm:$0xff]
    %v140 = vld [vmem:[#allocation2 + $0x298] sm:$0xff]
    %v141 = vld [vmem:[#allocation2 + $0x2a0] sm:$0xff]
    %v142 = vld [vmem:[#allocation2 + $0x2a8] sm:$0xff]
    %v143 = vld [vmem:[#allocation2 + $0x2b0] sm:$0xff]
    %v144 = vld [vmem:[#allocation2 + $0x2b8] sm:$0xff]
    %v145 = vld [vmem:[#allocation2 + $0x2c0] sm:$0xff]
    %v146 = vld [vmem:[#allocation2 + $0x2c8] sm:$0xff]
    %v147 = vld [vmem:[#allocation2 + $0x2d0] sm:$0xff]
    %v148 = vld [vmem:[#allocation2 + $0x2d8] sm:$0xff]
    %v149 = vld [vmem:[#allocation2 + $0x2e0] sm:$0xff]
    %v150 = vld [vmem:[#allocation2 + $0x2e8] sm:$0xff]
    %v151 = vld [vmem:[#allocation2 + $0x2f0] sm:$0xff]
    %v152 = vld [vmem:[#allocation2 + $0x2f8] sm:$0xff]
    %v153 = vld [vmem:[#allocation2 + $0x300] sm:$0xff]
    %v154 = vld [vmem:[#allocation2 + $0x308] sm:$0xff]
    %v155 = vld [vmem:[#allocation2 + $0x310] sm:$0xff]
    %v156 = vld [vmem:[#allocation2 + $0x318] sm:$0xff]
    %v157 = vld [vmem:[#allocation2 + $0x320] sm:$0xff]
    %v158 = vld [vmem:[#allocation2 + $0x328] sm:$0xff]
    %v159 = vld [vmem:[#allocation2 + $0x330] sm:$0xff]
    %v160 = vld [vmem:[#allocation2 + $0x338] sm:$0xff]
    %v161 = vld [vmem:[#allocation2 + $0x340] sm:$0xff]
    %v162 = vld [vmem:[#allocation2 + $0x348] sm:$0xff]
    %v163 = vld [vmem:[#allocation2 + $0x350] sm:$0xff]
    %v164 = vld [vmem:[#allocation2 + $0x358] sm:$0xff]
    %v165 = vld [vmem:[#allocation2 + $0x360] sm:$0xff]
    %v166 = vld [vmem:[#allocation2 + $0x368] sm:$0xff]
    %v167 = vld [vmem:[#allocation2 + $0x370] sm:$0xff]
    %v168 = vld [vmem:[#allocation2 + $0x378] sm:$0xff]
    %v169 = vld [vmem:[#allocation2 + $0x380] sm:$0xff]
    %v170 = vld [vmem:[#allocation2 + $0x388] sm:$0xff]
    %v171 = vld [vmem:[#allocation2 + $0x390] sm:$0xff]
    %v172 = vld [vmem:[#allocation2 + $0x398] sm:$0xff]
    %v173 = vld [vmem:[#allocation2 + $0x3a0] sm:$0xff]
    %v174 = vld [vmem:[#allocation2 + $0x3a8] sm:$0xff]
    %v175 = vld [vmem:[#allocation2 + $0x3b0] sm:$0xff]
    %v176 = vld [vmem:[#allocation2 + $0x3b8] sm:$0xff]
    %v177 = vld [vmem:[#allocation2 + $0x3c0] sm:$0xff]
    %v178 = vld [vmem:[#allocation2 + $0x3c8] sm:$0xff]
    %v179 = vld [vmem:[#allocation2 + $0x3d0] sm:$0xff]
    %v180 = vld [vmem:[#allocation2 + $0x3d8] sm:$0xff]
    %v181 = vld [vmem:[#allocation2 + $0x3e0] sm:$0xff]
    %v182 = vld [vmem:[#allocation2 + $0x3e8] sm:$0xff]
    %v183 = vld [vmem:[#allocation2 + $0x3f0] sm:$0xff]
    %v184 = vld [vmem:[#allocation2 + $0x3f8] sm:$0xff]
    %v185 = vld [vmem:[%s2] sm:$0xf]
    %v187 = vlaneseq
    %v188 = vshrl.u32 %v187, 7
    %v189 = vsub.s32 0, %v188
    %v190 = vrot.slane %v185, %v189
    %v191 = vlaneseq
    %v192 = vshrl.u32 %v191, 7
    %v193 = vsub.s32 1, %v192
    %v194 = vrot.slane %v185, %v193
    %v195 = vlaneseq
    %v196 = vshrl.u32 %v195, 7
    %v197 = vsub.s32 2, %v196
    %v198 = vrot.slane %v185, %v197
    %v199 = vlaneseq
    %v200 = vshrl.u32 %v199, 7
    %v201 = vsub.s32 3, %v200
    %v202 = vrot.slane %v185, %v201
    %v209 = vunpack.c.l.b16 %v55
    %v210 = vunpack.c.h.b16 %v55
    %v211 = vunpack.c.l.b16 %v56
    %v212 = vunpack.c.h.b16 %v56
    %v213 = vpack.c.b16 %v209, %v209
    %v214 = vpack.c.b16 %v210, %v210
    %v215 = vpack.c.b16 %v211, %v211
    %v216 = vpack.c.b16 %v212, %v212
    %v349 = vunpack.c.l.b16 %v57
    %v350 = vunpack.c.h.b16 %v57
    %v351 = vunpack.c.l.b16 %v58
    %v352 = vunpack.c.h.b16 %v58
    %v353 = vunpack.c.l.b16 %v59
    %v354 = vunpack.c.h.b16 %v59
    %v355 = vunpack.c.l.b16 %v60
    %v356 = vunpack.c.h.b16 %v60
    %v357 = vunpack.c.l.b16 %v61
    %v358 = vunpack.c.h.b16 %v61
    %v359 = vunpack.c.l.b16 %v62
    %v360 = vunpack.c.h.b16 %v62
    %v361 = vunpack.c.l.b16 %v63
    %v362 = vunpack.c.h.b16 %v63
    %v363 = vunpack.c.l.b16 %v64
    %v364 = vunpack.c.h.b16 %v64
    %v365 = vunpack.c.l.b16 %v65
    %v366 = vunpack.c.h.b16 %v65
    %v367 = vunpack.c.l.b16 %v66
    %v368 = vunpack.c.h.b16 %v66
    %v369 = vunpack.c.l.b16 %v67
    %v370 = vunpack.c.h.b16 %v67
    %v371 = vunpack.c.l.b16 %v68
    %v372 = vunpack.c.h.b16 %v68
    %v373 = vunpack.c.l.b16 %v69
    %v374 = vunpack.c.h.b16 %v69
    %v375 = vunpack.c.l.b16 %v70
    %v376 = vunpack.c.h.b16 %v70
    %v377 = vunpack.c.l.b16 %v71
    %v378 = vunpack.c.h.b16 %v71
    %v379 = vunpack.c.l.b16 %v72
    %v380 = vunpack.c.h.b16 %v72
    %v381 = vunpack.c.l.b16 %v73
    %v382 = vunpack.c.h.b16 %v73
    %v383 = vunpack.c.l.b16 %v74
    %v384 = vunpack.c.h.b16 %v74
    %v385 = vunpack.c.l.b16 %v75
    %v386 = vunpack.c.h.b16 %v75
    %v387 = vunpack.c.l.b16 %v76
    %v388 = vunpack.c.h.b16 %v76
    %v389 = vunpack.c.l.b16 %v77
    %v390 = vunpack.c.h.b16 %v77
    %v391 = vunpack.c.l.b16 %v78
    %v392 = vunpack.c.h.b16 %v78
    %v393 = vunpack.c.l.b16 %v79
    %v394 = vunpack.c.h.b16 %v79
    %v395 = vunpack.c.l.b16 %v80
    %v396 = vunpack.c.h.b16 %v80
    %v397 = vunpack.c.l.b16 %v81
    %v398 = vunpack.c.h.b16 %v81
    %v399 = vunpack.c.l.b16 %v82
    %v400 = vunpack.c.h.b16 %v82
    %v401 = vunpack.c.l.b16 %v83
    %v402 = vunpack.c.h.b16 %v83
    %v403 = vunpack.c.l.b16 %v84
    %v404 = vunpack.c.h.b16 %v84
    %v405 = vunpack.c.l.b16 %v85
    %v406 = vunpack.c.h.b16 %v85
    %v407 = vunpack.c.l.b16 %v86
    %v408 = vunpack.c.h.b16 %v86
    %v409 = vunpack.c.l.b16 %v87
    %v410 = vunpack.c.h.b16 %v87
    %v411 = vunpack.c.l.b16 %v88
    %v412 = vunpack.c.h.b16 %v88
    %v413 = vunpack.c.l.b16 %v89
    %v414 = vunpack.c.h.b16 %v89
    %v415 = vunpack.c.l.b16 %v90
    %v416 = vunpack.c.h.b16 %v90
    %v417 = vunpack.c.l.b16 %v91
    %v418 = vunpack.c.h.b16 %v91
    %v419 = vunpack.c.l.b16 %v92
    %v420 = vunpack.c.h.b16 %v92
    %v421 = vunpack.c.l.b16 %v93
    %v422 = vunpack.c.h.b16 %v93
    %v423 = vunpack.c.l.b16 %v94
    %v424 = vunpack.c.h.b16 %v94
    %v425 = vunpack.c.l.b16 %v95
    %v426 = vunpack.c.h.b16 %v95
    %v427 = vunpack.c.l.b16 %v96
    %v428 = vunpack.c.h.b16 %v96
    %v429 = vunpack.c.l.b16 %v97
    %v430 = vunpack.c.h.b16 %v97
    %v431 = vunpack.c.l.b16 %v98
    %v432 = vunpack.c.h.b16 %v98
    %v433 = vunpack.c.l.b16 %v99
    %v434 = vunpack.c.h.b16 %v99
    %v435 = vunpack.c.l.b16 %v100
    %v436 = vunpack.c.h.b16 %v100
    %v437 = vunpack.c.l.b16 %v101
    %v438 = vunpack.c.h.b16 %v101
    %v439 = vunpack.c.l.b16 %v102
    %v440 = vunpack.c.h.b16 %v102
    %v441 = vunpack.c.l.b16 %v103
    %v442 = vunpack.c.h.b16 %v103
    %v443 = vunpack.c.l.b16 %v104
    %v444 = vunpack.c.h.b16 %v104
    %v445 = vunpack.c.l.b16 %v105
    %v446 = vunpack.c.h.b16 %v105
    %v447 = vunpack.c.l.b16 %v106
    %v448 = vunpack.c.h.b16 %v106
    %v449 = vunpack.c.l.b16 %v107
    %v450 = vunpack.c.h.b16 %v107
    %v451 = vunpack.c.l.b16 %v108
    %v452 = vunpack.c.h.b16 %v108
    %v453 = vunpack.c.l.b16 %v109
    %v454 = vunpack.c.h.b16 %v109
    %v455 = vunpack.c.l.b16 %v110
    %v456 = vunpack.c.h.b16 %v110
    %v457 = vunpack.c.l.b16 %v111
    %v458 = vunpack.c.h.b16 %v111
    %v459 = vunpack.c.l.b16 %v112
    %v460 = vunpack.c.h.b16 %v112
    %v461 = vunpack.c.l.b16 %v113
    %v462 = vunpack.c.h.b16 %v113
    %v463 = vunpack.c.l.b16 %v114
    %v464 = vunpack.c.h.b16 %v114
    %v465 = vunpack.c.l.b16 %v115
    %v466 = vunpack.c.h.b16 %v115
    %v467 = vunpack.c.l.b16 %v116
    %v468 = vunpack.c.h.b16 %v116
    %v469 = vunpack.c.l.b16 %v117
    %v470 = vunpack.c.h.b16 %v117
    %v471 = vunpack.c.l.b16 %v118
    %v472 = vunpack.c.h.b16 %v118
    %v473 = vunpack.c.l.b16 %v119
    %v474 = vunpack.c.h.b16 %v119
    %v475 = vunpack.c.l.b16 %v120
    %v476 = vunpack.c.h.b16 %v120
    %v477 = vunpack.c.l.b16 %v121
    %v478 = vunpack.c.h.b16 %v121
    %v479 = vunpack.c.l.b16 %v122
    %v480 = vunpack.c.h.b16 %v122
    %v481 = vunpack.c.l.b16 %v123
    %v482 = vunpack.c.h.b16 %v123
    %v483 = vunpack.c.l.b16 %v124
    %v484 = vunpack.c.h.b16 %v124
    %v485 = vunpack.c.l.b16 %v125
    %v486 = vunpack.c.h.b16 %v125
    %v487 = vunpack.c.l.b16 %v126
    %v488 = vunpack.c.h.b16 %v126
    %v489 = vunpack.c.l.b16 %v127
    %v490 = vunpack.c.h.b16 %v127
    %v491 = vunpack.c.l.b16 %v128
    %v492 = vunpack.c.h.b16 %v128
    %v493 = vunpack.c.l.b16 %v129
    %v494 = vunpack.c.h.b16 %v129
    %v495 = vunpack.c.l.b16 %v130
    %v496 = vunpack.c.h.b16 %v130
    %v497 = vunpack.c.l.b16 %v131
    %v498 = vunpack.c.h.b16 %v131
    %v499 = vunpack.c.l.b16 %v132
    %v500 = vunpack.c.h.b16 %v132
    %v501 = vunpack.c.l.b16 %v133
    %v502 = vunpack.c.h.b16 %v133
    %v503 = vunpack.c.l.b16 %v134
    %v504 = vunpack.c.h.b16 %v134
    %v505 = vunpack.c.l.b16 %v135
    %v506 = vunpack.c.h.b16 %v135
    %v507 = vunpack.c.l.b16 %v136
    %v508 = vunpack.c.h.b16 %v136
    %v509 = vunpack.c.l.b16 %v137
    %v510 = vunpack.c.h.b16 %v137
    %v511 = vunpack.c.l.b16 %v138
    %v512 = vunpack.c.h.b16 %v138
    %v513 = vunpack.c.l.b16 %v139
    %v514 = vunpack.c.h.b16 %v139
    %v515 = vunpack.c.l.b16 %v140
    %v516 = vunpack.c.h.b16 %v140
    %v517 = vunpack.c.l.b16 %v141
    %v518 = vunpack.c.h.b16 %v141
    %v519 = vunpack.c.l.b16 %v142
    %v520 = vunpack.c.h.b16 %v142
    %v521 = vunpack.c.l.b16 %v143
    %v522 = vunpack.c.h.b16 %v143
    %v523 = vunpack.c.l.b16 %v144
    %v524 = vunpack.c.h.b16 %v144
    %v525 = vunpack.c.l.b16 %v145
    %v526 = vunpack.c.h.b16 %v145
    %v527 = vunpack.c.l.b16 %v146
    %v528 = vunpack.c.h.b16 %v146
    %v529 = vunpack.c.l.b16 %v147
    %v530 = vunpack.c.h.b16 %v147
    %v531 = vunpack.c.l.b16 %v148
    %v532 = vunpack.c.h.b16 %v148
    %v533 = vunpack.c.l.b16 %v149
    %v534 = vunpack.c.h.b16 %v149
    %v535 = vunpack.c.l.b16 %v150
    %v536 = vunpack.c.h.b16 %v150
    %v537 = vunpack.c.l.b16 %v151
    %v538 = vunpack.c.h.b16 %v151
    %v539 = vunpack.c.l.b16 %v152
    %v540 = vunpack.c.h.b16 %v152
    %v541 = vunpack.c.l.b16 %v153
    %v542 = vunpack.c.h.b16 %v153
    %v543 = vunpack.c.l.b16 %v154
    %v544 = vunpack.c.h.b16 %v154
    %v545 = vunpack.c.l.b16 %v155
    %v546 = vunpack.c.h.b16 %v155
    %v547 = vunpack.c.l.b16 %v156
    %v548 = vunpack.c.h.b16 %v156
    %v549 = vunpack.c.l.b16 %v157
    %v550 = vunpack.c.h.b16 %v157
    %v551 = vunpack.c.l.b16 %v158
    %v552 = vunpack.c.h.b16 %v158
    %v553 = vunpack.c.l.b16 %v159
    %v554 = vunpack.c.h.b16 %v159
    %v555 = vunpack.c.l.b16 %v160
    %v556 = vunpack.c.h.b16 %v160
    %v557 = vunpack.c.l.b16 %v161
    %v558 = vunpack.c.h.b16 %v161
    %v559 = vunpack.c.l.b16 %v162
    %v560 = vunpack.c.h.b16 %v162
    %v561 = vunpack.c.l.b16 %v163
    %v562 = vunpack.c.h.b16 %v163
    %v563 = vunpack.c.l.b16 %v164
    %v564 = vunpack.c.h.b16 %v164
    %v565 = vunpack.c.l.b16 %v165
    %v566 = vunpack.c.h.b16 %v165
    %v567 = vunpack.c.l.b16 %v166
    %v568 = vunpack.c.h.b16 %v166
    %v569 = vunpack.c.l.b16 %v167
    %v570 = vunpack.c.h.b16 %v167
    %v571 = vunpack.c.l.b16 %v168
    %v572 = vunpack.c.h.b16 %v168
    %v573 = vunpack.c.l.b16 %v169
    %v574 = vunpack.c.h.b16 %v169
    %v575 = vunpack.c.l.b16 %v170
    %v576 = vunpack.c.h.b16 %v170
    %v577 = vunpack.c.l.b16 %v171
    %v578 = vunpack.c.h.b16 %v171
    %v579 = vunpack.c.l.b16 %v172
    %v580 = vunpack.c.h.b16 %v172
    %v581 = vunpack.c.l.b16 %v173
    %v582 = vunpack.c.h.b16 %v173
    %v583 = vunpack.c.l.b16 %v174
    %v584 = vunpack.c.h.b16 %v174
    %v585 = vunpack.c.l.b16 %v175
    %v586 = vunpack.c.h.b16 %v175
    %v587 = vunpack.c.l.b16 %v176
    %v588 = vunpack.c.h.b16 %v176
    %v589 = vunpack.c.l.b16 %v177
    %v590 = vunpack.c.h.b16 %v177
    %v591 = vunpack.c.l.b16 %v178
    %v592 = vunpack.c.h.b16 %v178
    %v593 = vunpack.c.l.b16 %v179
    %v594 = vunpack.c.h.b16 %v179
    %v595 = vunpack.c.l.b16 %v180
    %v596 = vunpack.c.h.b16 %v180
    %v597 = vunpack.c.l.b16 %v181
    %v598 = vunpack.c.h.b16 %v181
    %v599 = vunpack.c.l.b16 %v182
    %v600 = vunpack.c.h.b16 %v182
    %v601 = vunpack.c.l.b16 %v183
    %v602 = vunpack.c.h.b16 %v183
    %v603 = vunpack.c.l.b16 %v184
    %v604 = vunpack.c.h.b16 %v184
    %v605 = vpack.c.b16 %v353, %v349
    %v606 = vpack.c.b16 %v354, %v350
    %v607 = vpack.c.b16 %v355, %v351
    %v608 = vpack.c.b16 %v356, %v352
    %v609 = vpack.c.b16 %v361, %v357
    %v610 = vpack.c.b16 %v362, %v358
    %v611 = vpack.c.b16 %v363, %v359
    %v612 = vpack.c.b16 %v364, %v360
    %v613 = vpack.c.b16 %v369, %v365
    %v614 = vpack.c.b16 %v370, %v366
    %v615 = vpack.c.b16 %v371, %v367
    %v616 = vpack.c.b16 %v372, %v368
    %v617 = vpack.c.b16 %v377, %v373
    %v618 = vpack.c.b16 %v378, %v374
    %v619 = vpack.c.b16 %v379, %v375
    %v620 = vpack.c.b16 %v380, %v376
    %v621 = vpack.c.b16 %v385, %v381
    %v622 = vpack.c.b16 %v386, %v382
    %v623 = vpack.c.b16 %v387, %v383
    %v624 = vpack.c.b16 %v388, %v384
    %v625 = vpack.c.b16 %v393, %v389
    %v626 = vpack.c.b16 %v394, %v390
    %v627 = vpack.c.b16 %v395, %v391
    %v628 = vpack.c.b16 %v396, %v392
    %v629 = vpack.c.b16 %v401, %v397
    %v630 = vpack.c.b16 %v402, %v398
    %v631 = vpack.c.b16 %v403, %v399
    %v632 = vpack.c.b16 %v404, %v400
    %v633 = vpack.c.b16 %v409, %v405
    %v634 = vpack.c.b16 %v410, %v406
    %v635 = vpack.c.b16 %v411, %v407
    %v636 = vpack.c.b16 %v412, %v408
    %v637 = vpack.c.b16 %v417, %v413
    %v638 = vpack.c.b16 %v418, %v414
    %v639 = vpack.c.b16 %v419, %v415
    %v640 = vpack.c.b16 %v420, %v416
    %v641 = vpack.c.b16 %v425, %v421
    %v642 = vpack.c.b16 %v426, %v422
    %v643 = vpack.c.b16 %v427, %v423
    %v644 = vpack.c.b16 %v428, %v424
    %v645 = vpack.c.b16 %v433, %v429
    %v646 = vpack.c.b16 %v434, %v430
    %v647 = vpack.c.b16 %v435, %v431
    %v648 = vpack.c.b16 %v436, %v432
    %v649 = vpack.c.b16 %v441, %v437
    %v650 = vpack.c.b16 %v442, %v438
    %v651 = vpack.c.b16 %v443, %v439
    %v652 = vpack.c.b16 %v444, %v440
    %v653 = vpack.c.b16 %v449, %v445
    %v654 = vpack.c.b16 %v450, %v446
    %v655 = vpack.c.b16 %v451, %v447
    %v656 = vpack.c.b16 %v452, %v448
    %v657 = vpack.c.b16 %v457, %v453
    %v658 = vpack.c.b16 %v458, %v454
    %v659 = vpack.c.b16 %v459, %v455
    %v660 = vpack.c.b16 %v460, %v456
    %v661 = vpack.c.b16 %v465, %v461
    %v662 = vpack.c.b16 %v466, %v462
    %v663 = vpack.c.b16 %v467, %v463
    %v664 = vpack.c.b16 %v468, %v464
    %v665 = vpack.c.b16 %v473, %v469
    %v666 = vpack.c.b16 %v474, %v470
    %v667 = vpack.c.b16 %v475, %v471
    %v668 = vpack.c.b16 %v476, %v472
    %v669 = vpack.c.b16 %v481, %v477
    %v670 = vpack.c.b16 %v482, %v478
    %v671 = vpack.c.b16 %v483, %v479
    %v672 = vpack.c.b16 %v484, %v480
    %v673 = vpack.c.b16 %v489, %v485
    %v674 = vpack.c.b16 %v490, %v486
    %v675 = vpack.c.b16 %v491, %v487
    %v676 = vpack.c.b16 %v492, %v488
    %v677 = vpack.c.b16 %v497, %v493
    %v678 = vpack.c.b16 %v498, %v494
    %v679 = vpack.c.b16 %v499, %v495
    %v680 = vpack.c.b16 %v500, %v496
    %v681 = vpack.c.b16 %v505, %v501
    %v682 = vpack.c.b16 %v506, %v502
    %v683 = vpack.c.b16 %v507, %v503
    %v684 = vpack.c.b16 %v508, %v504
    %v685 = vpack.c.b16 %v513, %v509
    %v686 = vpack.c.b16 %v514, %v510
    %v687 = vpack.c.b16 %v515, %v511
    %v688 = vpack.c.b16 %v516, %v512
    %v689 = vpack.c.b16 %v521, %v517
    %v690 = vpack.c.b16 %v522, %v518
    %v691 = vpack.c.b16 %v523, %v519
    %v692 = vpack.c.b16 %v524, %v520
    %v693 = vpack.c.b16 %v529, %v525
    %v694 = vpack.c.b16 %v530, %v526
    %v695 = vpack.c.b16 %v531, %v527
    %v696 = vpack.c.b16 %v532, %v528
    %v697 = vpack.c.b16 %v537, %v533
    %v698 = vpack.c.b16 %v538, %v534
    %v699 = vpack.c.b16 %v539, %v535
    %v700 = vpack.c.b16 %v540, %v536
    %v701 = vpack.c.b16 %v545, %v541
    %v702 = vpack.c.b16 %v546, %v542
    %v703 = vpack.c.b16 %v547, %v543
    %v704 = vpack.c.b16 %v548, %v544
    %v705 = vpack.c.b16 %v553, %v549
    %v706 = vpack.c.b16 %v554, %v550
    %v707 = vpack.c.b16 %v555, %v551
    %v708 = vpack.c.b16 %v556, %v552
    %v709 = vpack.c.b16 %v561, %v557
    %v710 = vpack.c.b16 %v562, %v558
    %v711 = vpack.c.b16 %v563, %v559
    %v712 = vpack.c.b16 %v564, %v560
    %v713 = vpack.c.b16 %v569, %v565
    %v714 = vpack.c.b16 %v570, %v566
    %v715 = vpack.c.b16 %v571, %v567
    %v716 = vpack.c.b16 %v572, %v568
    %v717 = vpack.c.b16 %v577, %v573
    %v718 = vpack.c.b16 %v578, %v574
    %v719 = vpack.c.b16 %v579, %v575
    %v720 = vpack.c.b16 %v580, %v576
    %v721 = vpack.c.b16 %v585, %v581
    %v722 = vpack.c.b16 %v586, %v582
    %v723 = vpack.c.b16 %v587, %v583
    %v724 = vpack.c.b16 %v588, %v584
    %v725 = vpack.c.b16 %v593, %v589
    %v726 = vpack.c.b16 %v594, %v590
    %v727 = vpack.c.b16 %v595, %v591
    %v728 = vpack.c.b16 %v596, %v592
    %v729 = vpack.c.b16 %v601, %v597
    %v730 = vpack.c.b16 %v602, %v598
    %v731 = vpack.c.b16 %v603, %v599
    %v732 = vpack.c.b16 %v604, %v600
    %861 = vmatprep.subr.bf16.mxu0 %v606
    %862 = vmatpush1.bf16.msra.mxu0 %v605
    %863 = vmatprep.subr.bf16.mxu0 %v610
    %864 = vmatpush1.bf16.msra.mxu0 %v609
    %865 = vmatprep.subr.bf16.mxu0 %v614
    %866 = vmatpush1.bf16.msra.mxu0 %v613
    %867 = vmatprep.subr.bf16.mxu0 %v618
    %868 = vmatpush1.bf16.msra.mxu0 %v617
    %869 = vmatprep.subr.bf16.mxu0 %v622
    %870 = vmatpush1.bf16.msra.mxu0 %v621
    %871 = vmatprep.subr.bf16.mxu0 %v626
    %872 = vmatpush1.bf16.msra.mxu0 %v625
    %873 = vmatprep.subr.bf16.mxu0 %v630
    %874 = vmatpush1.bf16.msra.mxu0 %v629
    %875 = vmatprep.subr.bf16.mxu0 %v634
    %876 = vmatpush1.bf16.msra.mxu0 %v633
    %877 = vmatprep.subr.bf16.mxu0 %v638
    %878 = vmatpush1.bf16.msra.mxu0 %v637
    %879 = vmatprep.subr.bf16.mxu0 %v642
    %880 = vmatpush1.bf16.msra.mxu0 %v641
    %881 = vmatprep.subr.bf16.mxu0 %v646
    %882 = vmatpush1.bf16.msra.mxu0 %v645
    %883 = vmatprep.subr.bf16.mxu0 %v650
    %884 = vmatpush1.bf16.msra.mxu0 %v649
    %885 = vmatprep.subr.bf16.mxu0 %v654
    %886 = vmatpush1.bf16.msra.mxu0 %v653
    %887 = vmatprep.subr.bf16.mxu0 %v658
    %888 = vmatpush1.bf16.msra.mxu0 %v657
    %889 = vmatprep.subr.bf16.mxu0 %v662
    %890 = vmatpush1.bf16.msra.mxu0 %v661
    %891 = vmatprep.subr.bf16.mxu0 %v666
    %892 = vmatpush1.bf16.msra.mxu0 %v665
    %893 = vmatprep.mubr.bf16.mxu0 %v214
    %894 = vmatmul.mubr.bf16.gmra.mrb[0].mxu0 %v213
    %v895 = vpop.f32.mrb[0].mxu0
    %v896 = vadd.f32 %v190, %v895
    %v897 = vpop.f32.mrb[0].mxu0
    %v898 = vadd.f32 %v194, %v897
    %v899 = vpop.f32.mrb[0].mxu0
    %v900 = vpop.f32.mrb[0].mxu0
    %901 = vdwg.mxu0
    %902 = vmatprep.subr.bf16.mxu0 %v670
    %903 = vmatpush1.bf16.msra.mxu0 %v669
    %904 = vmatprep.subr.bf16.mxu0 %v674
    %905 = vmatpush1.bf16.msra.mxu0 %v673
    %906 = vmatprep.subr.bf16.mxu0 %v678
    %907 = vmatpush1.bf16.msra.mxu0 %v677
    %908 = vmatprep.subr.bf16.mxu0 %v682
    %909 = vmatpush1.bf16.msra.mxu0 %v681
    %910 = vmatprep.subr.bf16.mxu0 %v686
    %911 = vmatpush1.bf16.msra.mxu0 %v685
    %912 = vmatprep.subr.bf16.mxu0 %v690
    %913 = vmatpush1.bf16.msra.mxu0 %v689
    %914 = vmatprep.subr.bf16.mxu0 %v694
    %915 = vmatpush1.bf16.msra.mxu0 %v693
    %916 = vmatprep.subr.bf16.mxu0 %v698
    %917 = vmatpush1.bf16.msra.mxu0 %v697
    %918 = vmatprep.subr.bf16.mxu0 %v702
    %919 = vmatpush1.bf16.msra.mxu0 %v701
    %920 = vmatprep.subr.bf16.mxu0 %v706
    %921 = vmatpush1.bf16.msra.mxu0 %v705
    %922 = vmatprep.subr.bf16.mxu0 %v710
    %923 = vmatpush1.bf16.msra.mxu0 %v709
    %924 = vmatprep.subr.bf16.mxu0 %v714
    %925 = vmatpush1.bf16.msra.mxu0 %v713
    %926 = vmatprep.subr.bf16.mxu0 %v718
    %927 = vmatpush1.bf16.msra.mxu0 %v717
    %928 = vmatprep.subr.bf16.mxu0 %v722
    %929 = vmatpush1.bf16.msra.mxu0 %v721
    %930 = vmatprep.subr.bf16.mxu0 %v726
    %931 = vmatpush1.bf16.msra.mxu0 %v725
    %932 = vmatprep.subr.bf16.mxu0 %v730
    %933 = vmatpush1.bf16.msra.mxu0 %v729
    %934 = vmatprep.mubr.bf16.mxu0 %v216
    %935 = vmatmul.mubr.bf16.gmra.mrb[0].mxu0 %v215
    %v936 = vpop.f32.mrb[0].mxu0
    %v937 = vadd.f32 %v896, %v936
    %v938 = vpop.f32.mrb[0].mxu0
    %v939 = vadd.f32 %v898, %v938
    %v940 = vpop.f32.mrb[0].mxu0
    %v941 = vpop.f32.mrb[0].mxu0
    %942 = vdwg.mxu0
    %943 = vmatprep.subr.bf16.mxu0 %v608
    %944 = vmatpush1.bf16.msra.mxu0 %v607
    %945 = vmatprep.subr.bf16.mxu0 %v612
    %946 = vmatpush1.bf16.msra.mxu0 %v611
    %947 = vmatprep.subr.bf16.mxu0 %v616
    %948 = vmatpush1.bf16.msra.mxu0 %v615
    %949 = vmatprep.subr.bf16.mxu0 %v620
    %950 = vmatpush1.bf16.msra.mxu0 %v619
    %951 = vmatprep.subr.bf16.mxu0 %v624
    %952 = vmatpush1.bf16.msra.mxu0 %v623
    %953 = vmatprep.subr.bf16.mxu0 %v628
    %954 = vmatpush1.bf16.msra.mxu0 %v627
    %955 = vmatprep.subr.bf16.mxu0 %v632
    %956 = vmatpush1.bf16.msra.mxu0 %v631
    %957 = vmatprep.subr.bf16.mxu0 %v636
    %958 = vmatpush1.bf16.msra.mxu0 %v635
    %959 = vmatprep.subr.bf16.mxu0 %v640
    %960 = vmatpush1.bf16.msra.mxu0 %v639
    %961 = vmatprep.subr.bf16.mxu0 %v644
    %962 = vmatpush1.bf16.msra.mxu0 %v643
    %963 = vmatprep.subr.bf16.mxu0 %v648
    %964 = vmatpush1.bf16.msra.mxu0 %v647
    %965 = vmatprep.subr.bf16.mxu0 %v652
    %966 = vmatpush1.bf16.msra.mxu0 %v651
    %967 = vmatprep.subr.bf16.mxu0 %v656
    %968 = vmatpush1.bf16.msra.mxu0 %v655
    %969 = vmatprep.subr.bf16.mxu0 %v660
    %970 = vmatpush1.bf16.msra.mxu0 %v659
    %971 = vmatprep.subr.bf16.mxu0 %v664
    %972 = vmatpush1.bf16.msra.mxu0 %v663
    %973 = vmatprep.subr.bf16.mxu0 %v668
    %974 = vmatpush1.bf16.msra.mxu0 %v667
    %975 = vmatprep.mubr.bf16.mxu0 %v214
    %976 = vmatmul.mubr.bf16.gmra.mrb[0].mxu0 %v213
    %v977 = vpop.f32.mrb[0].mxu0
    %v978 = vadd.f32 %v198, %v977
    %v979 = vpop.f32.mrb[0].mxu0
    %v980 = vadd.f32 %v202, %v979
    %v981 = vpop.f32.mrb[0].mxu0
    %v982 = vpop.f32.mrb[0].mxu0
    %983 = vdwg.mxu0
    %984 = vmatprep.subr.bf16.mxu0 %v672
    %985 = vmatpush1.bf16.msra.mxu0 %v671
    %986 = vmatprep.subr.bf16.mxu0 %v676
    %987 = vmatpush1.bf16.msra.mxu0 %v675
    %988 = vmatprep.subr.bf16.mxu0 %v680
    %989 = vmatpush1.bf16.msra.mxu0 %v679
    %990 = vmatprep.subr.bf16.mxu0 %v684
    %991 = vmatpush1.bf16.msra.mxu0 %v683
    %992 = vmatprep.subr.bf16.mxu0 %v688
    %993 = vmatpush1.bf16.msra.mxu0 %v687
    %994 = vmatprep.subr.bf16.mxu0 %v692
    %995 = vmatpush1.bf16.msra.mxu0 %v691
    %996 = vmatprep.subr.bf16.mxu0 %v696
    %997 = vmatpush1.bf16.msra.mxu0 %v695
    %998 = vmatprep.subr.bf16.mxu0 %v700
    %999 = vmatpush1.bf16.msra.mxu0 %v699
    %1000 = vmatprep.subr.bf16.mxu0 %v704
    %1001 = vmatpush1.bf16.msra.mxu0 %v703
    %1002 = vmatprep.subr.bf16.mxu0 %v708
    %1003 = vmatpush1.bf16.msra.mxu0 %v707
    %1004 = vmatprep.subr.bf16.mxu0 %v712
    %1005 = vmatpush1.bf16.msra.mxu0 %v711
    %1006 = vmatprep.subr.bf16.mxu0 %v716
    %1007 = vmatpush1.bf16.msra.mxu0 %v715
    %1008 = vmatprep.subr.bf16.mxu0 %v720
    %1009 = vmatpush1.bf16.msra.mxu0 %v719
    %1010 = vmatprep.subr.bf16.mxu0 %v724
    %1011 = vmatpush1.bf16.msra.mxu0 %v723
    %1012 = vmatprep.subr.bf16.mxu0 %v728
    %1013 = vmatpush1.bf16.msra.mxu0 %v727
    %1014 = vmatprep.subr.bf16.mxu0 %v732
    %1015 = vmatpush1.bf16.msra.mxu0 %v731
    %1016 = vmatprep.mubr.bf16.mxu0 %v216
    %1017 = vmatmul.mubr.bf16.gmra.mrb[0].mxu0 %v215
    %v1018 = vpop.f32.mrb[0].mxu0
    %v1019 = vadd.f32 %v978, %v1018
    %v1020 = vpop.f32.mrb[0].mxu0
    %v1021 = vadd.f32 %v980, %v1020
    %v1022 = vpop.f32.mrb[0].mxu0
    %v1023 = vpop.f32.mrb[0].mxu0
    %1024 = vdwg.mxu0
    %v1025 = vmax.f32 %v937, 0.0
    %v1026 = vmax.f32 %v939, 0.0
    %v1027 = vmax.f32 %v1019, 0.0
    %v1028 = vmax.f32 %v1021, 0.0
    %v1029 = vpack.c.bf16 %v1025, %v1025
    %v1030 = vpack.c.bf16 %v1026, %v1026
    %v1031 = vpack.c.bf16 %v1027, %v1027
    %v1032 = vpack.c.bf16 %v1028, %v1028
    %v1033 = vld [vmem:[#allocation4] sm:$0xff]
    %v1034 = vld [vmem:[#allocation4 + $0x8] sm:$0xff]
    %v1035 = vld [vmem:[#allocation4 + $0x10] sm:$0xff]
    %v1036 = vld [vmem:[#allocation4 + $0x18] sm:$0xff]
    %v1037 = vld [vmem:[#allocation4 + $0x20] sm:$0xff]
    %v1038 = vld [vmem:[#allocation4 + $0x28] sm:$0xff]
    %v1039 = vld [vmem:[#allocation4 + $0x30] sm:$0xff]
    %v1040 = vld [vmem:[#allocation4 + $0x38] sm:$0xff]
    %v1041 = vld [vmem:[#allocation4 + $0x40] sm:$0xff]
    %v1042 = vld [vmem:[#allocation4 + $0x48] sm:$0xff]
    %v1043 = vld [vmem:[#allocation4 + $0x50] sm:$0xff]
    %v1044 = vld [vmem:[#allocation4 + $0x58] sm:$0xff]
    %v1045 = vld [vmem:[#allocation4 + $0x60] sm:$0xff]
    %v1046 = vld [vmem:[#allocation4 + $0x68] sm:$0xff]
    %v1047 = vld [vmem:[#allocation4 + $0x70] sm:$0xff]
    %v1048 = vld [vmem:[#allocation4 + $0x78] sm:$0xff]
    %v1049 = vld [vmem:[#allocation4 + $0x80] sm:$0xff]
    %v1050 = vld [vmem:[#allocation4 + $0x88] sm:$0xff]
    %v1051 = vld [vmem:[#allocation4 + $0x90] sm:$0xff]
    %v1052 = vld [vmem:[#allocation4 + $0x98] sm:$0xff]
    %v1053 = vld [vmem:[#allocation4 + $0xa0] sm:$0xff]
    %v1054 = vld [vmem:[#allocation4 + $0xa8] sm:$0xff]
    %v1055 = vld [vmem:[#allocation4 + $0xb0] sm:$0xff]
    %v1056 = vld [vmem:[#allocation4 + $0xb8] sm:$0xff]
    %v1057 = vld [vmem:[#allocation4 + $0xc0] sm:$0xff]
    %v1058 = vld [vmem:[#allocation4 + $0xc8] sm:$0xff]
    %v1059 = vld [vmem:[#allocation4 + $0xd0] sm:$0xff]
    %v1060 = vld [vmem:[#allocation4 + $0xd8] sm:$0xff]
    %v1061 = vld [vmem:[#allocation4 + $0xe0] sm:$0xff]
    %v1062 = vld [vmem:[#allocation4 + $0xe8] sm:$0xff]
    %v1063 = vld [vmem:[#allocation4 + $0xf0] sm:$0xff]
    %v1064 = vld [vmem:[#allocation4 + $0xf8] sm:$0xff]
    %v1065 = vld [vmem:[#allocation4 + $0x100] sm:$0xff]
    %v1066 = vld [vmem:[#allocation4 + $0x108] sm:$0xff]
    %v1067 = vld [vmem:[#allocation4 + $0x110] sm:$0xff]
    %v1068 = vld [vmem:[#allocation4 + $0x118] sm:$0xff]
    %v1069 = vld [vmem:[#allocation4 + $0x120] sm:$0xff]
    %v1070 = vld [vmem:[#allocation4 + $0x128] sm:$0xff]
    %v1071 = vld [vmem:[#allocation4 + $0x130] sm:$0xff]
    %v1072 = vld [vmem:[#allocation4 + $0x138] sm:$0xff]
    %v1073 = vld [vmem:[#allocation4 + $0x140] sm:$0xff]
    %v1074 = vld [vmem:[#allocation4 + $0x148] sm:$0xff]
    %v1075 = vld [vmem:[#allocation4 + $0x150] sm:$0xff]
    %v1076 = vld [vmem:[#allocation4 + $0x158] sm:$0xff]
    %v1077 = vld [vmem:[#allocation4 + $0x160] sm:$0xff]
    %v1078 = vld [vmem:[#allocation4 + $0x168] sm:$0xff]
    %v1079 = vld [vmem:[#allocation4 + $0x170] sm:$0xff]
    %v1080 = vld [vmem:[#allocation4 + $0x178] sm:$0xff]
    %v1081 = vld [vmem:[#allocation4 + $0x180] sm:$0xff]
    %v1082 = vld [vmem:[#allocation4 + $0x188] sm:$0xff]
    %v1083 = vld [vmem:[#allocation4 + $0x190] sm:$0xff]
    %v1084 = vld [vmem:[#allocation4 + $0x198] sm:$0xff]
    %v1085 = vld [vmem:[#allocation4 + $0x1a0] sm:$0xff]
    %v1086 = vld [vmem:[#allocation4 + $0x1a8] sm:$0xff]
    %v1087 = vld [vmem:[#allocation4 + $0x1b0] sm:$0xff]
    %v1088 = vld [vmem:[#allocation4 + $0x1b8] sm:$0xff]
    %v1089 = vld [vmem:[#allocation4 + $0x1c0] sm:$0xff]
    %v1090 = vld [vmem:[#allocation4 + $0x1c8] sm:$0xff]
    %v1091 = vld [vmem:[#allocation4 + $0x1d0] sm:$0xff]
    %v1092 = vld [vmem:[#allocation4 + $0x1d8] sm:$0xff]
    %v1093 = vld [vmem:[#allocation4 + $0x1e0] sm:$0xff]
    %v1094 = vld [vmem:[#allocation4 + $0x1e8] sm:$0xff]
    %v1095 = vld [vmem:[#allocation4 + $0x1f0] sm:$0xff]
    %v1096 = vld [vmem:[#allocation4 + $0x1f8] sm:$0xff]
    %v1097 = vld [vmem:[#allocation4 + $0x200] sm:$0xff]
    %v1098 = vld [vmem:[#allocation4 + $0x208] sm:$0xff]
    %v1099 = vld [vmem:[#allocation4 + $0x210] sm:$0xff]
    %v1100 = vld [vmem:[#allocation4 + $0x218] sm:$0xff]
    %v1101 = vld [vmem:[#allocation4 + $0x220] sm:$0xff]
    %v1102 = vld [vmem:[#allocation4 + $0x228] sm:$0xff]
    %v1103 = vld [vmem:[#allocation4 + $0x230] sm:$0xff]
    %v1104 = vld [vmem:[#allocation4 + $0x238] sm:$0xff]
    %v1105 = vld [vmem:[#allocation4 + $0x240] sm:$0xff]
    %v1106 = vld [vmem:[#allocation4 + $0x248] sm:$0xff]
    %v1107 = vld [vmem:[#allocation4 + $0x250] sm:$0xff]
    %v1108 = vld [vmem:[#allocation4 + $0x258] sm:$0xff]
    %v1109 = vld [vmem:[#allocation4 + $0x260] sm:$0xff]
    %v1110 = vld [vmem:[#allocation4 + $0x268] sm:$0xff]
    %v1111 = vld [vmem:[#allocation4 + $0x270] sm:$0xff]
    %v1112 = vld [vmem:[#allocation4 + $0x278] sm:$0xff]
    %v1113 = vld [vmem:[#allocation4 + $0x280] sm:$0xff]
    %v1114 = vld [vmem:[#allocation4 + $0x288] sm:$0xff]
    %v1115 = vld [vmem:[#allocation4 + $0x290] sm:$0xff]
    %v1116 = vld [vmem:[#allocation4 + $0x298] sm:$0xff]
    %v1117 = vld [vmem:[#allocation4 + $0x2a0] sm:$0xff]
    %v1118 = vld [vmem:[#allocation4 + $0x2a8] sm:$0xff]
    %v1119 = vld [vmem:[#allocation4 + $0x2b0] sm:$0xff]
    %v1120 = vld [vmem:[#allocation4 + $0x2b8] sm:$0xff]
    %v1121 = vld [vmem:[#allocation4 + $0x2c0] sm:$0xff]
    %v1122 = vld [vmem:[#allocation4 + $0x2c8] sm:$0xff]
    %v1123 = vld [vmem:[#allocation4 + $0x2d0] sm:$0xff]
    %v1124 = vld [vmem:[#allocation4 + $0x2d8] sm:$0xff]
    %v1125 = vld [vmem:[#allocation4 + $0x2e0] sm:$0xff]
    %v1126 = vld [vmem:[#allocation4 + $0x2e8] sm:$0xff]
    %v1127 = vld [vmem:[#allocation4 + $0x2f0] sm:$0xff]
    %v1128 = vld [vmem:[#allocation4 + $0x2f8] sm:$0xff]
    %v1129 = vld [vmem:[#allocation4 + $0x300] sm:$0xff]
    %v1130 = vld [vmem:[#allocation4 + $0x308] sm:$0xff]
    %v1131 = vld [vmem:[#allocation4 + $0x310] sm:$0xff]
    %v1132 = vld [vmem:[#allocation4 + $0x318] sm:$0xff]
    %v1133 = vld [vmem:[#allocation4 + $0x320] sm:$0xff]
    %v1134 = vld [vmem:[#allocation4 + $0x328] sm:$0xff]
    %v1135 = vld [vmem:[#allocation4 + $0x330] sm:$0xff]
    %v1136 = vld [vmem:[#allocation4 + $0x338] sm:$0xff]
    %v1137 = vld [vmem:[#allocation4 + $0x340] sm:$0xff]
    %v1138 = vld [vmem:[#allocation4 + $0x348] sm:$0xff]
    %v1139 = vld [vmem:[#allocation4 + $0x350] sm:$0xff]
    %v1140 = vld [vmem:[#allocation4 + $0x358] sm:$0xff]
    %v1141 = vld [vmem:[#allocation4 + $0x360] sm:$0xff]
    %v1142 = vld [vmem:[#allocation4 + $0x368] sm:$0xff]
    %v1143 = vld [vmem:[#allocation4 + $0x370] sm:$0xff]
    %v1144 = vld [vmem:[#allocation4 + $0x378] sm:$0xff]
    %v1145 = vld [vmem:[#allocation4 + $0x380] sm:$0xff]
    %v1146 = vld [vmem:[#allocation4 + $0x388] sm:$0xff]
    %v1147 = vld [vmem:[#allocation4 + $0x390] sm:$0xff]
    %v1148 = vld [vmem:[#allocation4 + $0x398] sm:$0xff]
    %v1149 = vld [vmem:[#allocation4 + $0x3a0] sm:$0xff]
    %v1150 = vld [vmem:[#allocation4 + $0x3a8] sm:$0xff]
    %v1151 = vld [vmem:[#allocation4 + $0x3b0] sm:$0xff]
    %v1152 = vld [vmem:[#allocation4 + $0x3b8] sm:$0xff]
    %v1153 = vld [vmem:[#allocation4 + $0x3c0] sm:$0xff]
    %v1154 = vld [vmem:[#allocation4 + $0x3c8] sm:$0xff]
    %v1155 = vld [vmem:[#allocation4 + $0x3d0] sm:$0xff]
    %v1156 = vld [vmem:[#allocation4 + $0x3d8] sm:$0xff]
    %v1157 = vld [vmem:[#allocation4 + $0x3e0] sm:$0xff]
    %v1158 = vld [vmem:[#allocation4 + $0x3e8] sm:$0xff]
    %v1159 = vld [vmem:[#allocation4 + $0x3f0] sm:$0xff]
    %v1160 = vld [vmem:[#allocation4 + $0x3f8] sm:$0xff]
    %v1161 = vld [vmem:[%s4] sm:$0xf]
    %v1163 = vlaneseq
    %v1164 = vshrl.u32 %v1163, 7
    %v1165 = vsub.s32 0, %v1164
    %v1166 = vrot.slane %v1161, %v1165
    %v1167 = vlaneseq
    %v1168 = vshrl.u32 %v1167, 7
    %v1169 = vsub.s32 1, %v1168
    %v1170 = vrot.slane %v1161, %v1169
    %v1171 = vlaneseq
    %v1172 = vshrl.u32 %v1171, 7
    %v1173 = vsub.s32 2, %v1172
    %v1174 = vrot.slane %v1161, %v1173
    %v1175 = vlaneseq
    %v1176 = vshrl.u32 %v1175, 7
    %v1177 = vsub.s32 3, %v1176
    %v1178 = vrot.slane %v1161, %v1177
    %v1311 = vunpack.c.l.b16 %v1033
    %v1312 = vunpack.c.h.b16 %v1033
    %v1313 = vunpack.c.l.b16 %v1034
    %v1314 = vunpack.c.h.b16 %v1034
    %v1315 = vunpack.c.l.b16 %v1035
    %v1316 = vunpack.c.h.b16 %v1035
    %v1317 = vunpack.c.l.b16 %v1036
    %v1318 = vunpack.c.h.b16 %v1036
    %v1319 = vunpack.c.l.b16 %v1037
    %v1320 = vunpack.c.h.b16 %v1037
    %v1321 = vunpack.c.l.b16 %v1038
    %v1322 = vunpack.c.h.b16 %v1038
    %v1323 = vunpack.c.l.b16 %v1039
    %v1324 = vunpack.c.h.b16 %v1039
    %v1325 = vunpack.c.l.b16 %v1040
    %v1326 = vunpack.c.h.b16 %v1040
    %v1327 = vunpack.c.l.b16 %v1041
    %v1328 = vunpack.c.h.b16 %v1041
    %v1329 = vunpack.c.l.b16 %v1042
    %v1330 = vunpack.c.h.b16 %v1042
    %v1331 = vunpack.c.l.b16 %v1043
    %v1332 = vunpack.c.h.b16 %v1043
    %v1333 = vunpack.c.l.b16 %v1044
    %v1334 = vunpack.c.h.b16 %v1044
    %v1335 = vunpack.c.l.b16 %v1045
    %v1336 = vunpack.c.h.b16 %v1045
    %v1337 = vunpack.c.l.b16 %v1046
    %v1338 = vunpack.c.h.b16 %v1046
    %v1339 = vunpack.c.l.b16 %v1047
    %v1340 = vunpack.c.h.b16 %v1047
    %v1341 = vunpack.c.l.b16 %v1048
    %v1342 = vunpack.c.h.b16 %v1048
    %v1343 = vunpack.c.l.b16 %v1049
    %v1344 = vunpack.c.h.b16 %v1049
    %v1345 = vunpack.c.l.b16 %v1050
    %v1346 = vunpack.c.h.b16 %v1050
    %v1347 = vunpack.c.l.b16 %v1051
    %v1348 = vunpack.c.h.b16 %v1051
    %v1349 = vunpack.c.l.b16 %v1052
    %v1350 = vunpack.c.h.b16 %v1052
    %v1351 = vunpack.c.l.b16 %v1053
    %v1352 = vunpack.c.h.b16 %v1053
    %v1353 = vunpack.c.l.b16 %v1054
    %v1354 = vunpack.c.h.b16 %v1054
    %v1355 = vunpack.c.l.b16 %v1055
    %v1356 = vunpack.c.h.b16 %v1055
    %v1357 = vunpack.c.l.b16 %v1056
    %v1358 = vunpack.c.h.b16 %v1056
    %v1359 = vunpack.c.l.b16 %v1057
    %v1360 = vunpack.c.h.b16 %v1057
    %v1361 = vunpack.c.l.b16 %v1058
    %v1362 = vunpack.c.h.b16 %v1058
    %v1363 = vunpack.c.l.b16 %v1059
    %v1364 = vunpack.c.h.b16 %v1059
    %v1365 = vunpack.c.l.b16 %v1060
    %v1366 = vunpack.c.h.b16 %v1060
    %v1367 = vunpack.c.l.b16 %v1061
    %v1368 = vunpack.c.h.b16 %v1061
    %v1369 = vunpack.c.l.b16 %v1062
    %v1370 = vunpack.c.h.b16 %v1062
    %v1371 = vunpack.c.l.b16 %v1063
    %v1372 = vunpack.c.h.b16 %v1063
    %v1373 = vunpack.c.l.b16 %v1064
    %v1374 = vunpack.c.h.b16 %v1064
    %v1375 = vunpack.c.l.b16 %v1065
    %v1376 = vunpack.c.h.b16 %v1065
    %v1377 = vunpack.c.l.b16 %v1066
    %v1378 = vunpack.c.h.b16 %v1066
    %v1379 = vunpack.c.l.b16 %v1067
    %v1380 = vunpack.c.h.b16 %v1067
    %v1381 = vunpack.c.l.b16 %v1068
    %v1382 = vunpack.c.h.b16 %v1068
    %v1383 = vunpack.c.l.b16 %v1069
    %v1384 = vunpack.c.h.b16 %v1069
    %v1385 = vunpack.c.l.b16 %v1070
    %v1386 = vunpack.c.h.b16 %v1070
    %v1387 = vunpack.c.l.b16 %v1071
    %v1388 = vunpack.c.h.b16 %v1071
    %v1389 = vunpack.c.l.b16 %v1072
    %v1390 = vunpack.c.h.b16 %v1072
    %v1391 = vunpack.c.l.b16 %v1073
    %v1392 = vunpack.c.h.b16 %v1073
    %v1393 = vunpack.c.l.b16 %v1074
    %v1394 = vunpack.c.h.b16 %v1074
    %v1395 = vunpack.c.l.b16 %v1075
    %v1396 = vunpack.c.h.b16 %v1075
    %v1397 = vunpack.c.l.b16 %v1076
    %v1398 = vunpack.c.h.b16 %v1076
    %v1399 = vunpack.c.l.b16 %v1077
    %v1400 = vunpack.c.h.b16 %v1077
    %v1401 = vunpack.c.l.b16 %v1078
    %v1402 = vunpack.c.h.b16 %v1078
    %v1403 = vunpack.c.l.b16 %v1079
    %v1404 = vunpack.c.h.b16 %v1079
    %v1405 = vunpack.c.l.b16 %v1080
    %v1406 = vunpack.c.h.b16 %v1080
    %v1407 = vunpack.c.l.b16 %v1081
    %v1408 = vunpack.c.h.b16 %v1081
    %v1409 = vunpack.c.l.b16 %v1082
    %v1410 = vunpack.c.h.b16 %v1082
    %v1411 = vunpack.c.l.b16 %v1083
    %v1412 = vunpack.c.h.b16 %v1083
    %v1413 = vunpack.c.l.b16 %v1084
    %v1414 = vunpack.c.h.b16 %v1084
    %v1415 = vunpack.c.l.b16 %v1085
    %v1416 = vunpack.c.h.b16 %v1085
    %v1417 = vunpack.c.l.b16 %v1086
    %v1418 = vunpack.c.h.b16 %v1086
    %v1419 = vunpack.c.l.b16 %v1087
    %v1420 = vunpack.c.h.b16 %v1087
    %v1421 = vunpack.c.l.b16 %v1088
    %v1422 = vunpack.c.h.b16 %v1088
    %v1423 = vunpack.c.l.b16 %v1089
    %v1424 = vunpack.c.h.b16 %v1089
    %v1425 = vunpack.c.l.b16 %v1090
    %v1426 = vunpack.c.h.b16 %v1090
    %v1427 = vunpack.c.l.b16 %v1091
    %v1428 = vunpack.c.h.b16 %v1091
    %v1429 = vunpack.c.l.b16 %v1092
    %v1430 = vunpack.c.h.b16 %v1092
    %v1431 = vunpack.c.l.b16 %v1093
    %v1432 = vunpack.c.h.b16 %v1093
    %v1433 = vunpack.c.l.b16 %v1094
    %v1434 = vunpack.c.h.b16 %v1094
    %v1435 = vunpack.c.l.b16 %v1095
    %v1436 = vunpack.c.h.b16 %v1095
    %v1437 = vunpack.c.l.b16 %v1096
    %v1438 = vunpack.c.h.b16 %v1096
    %v1439 = vunpack.c.l.b16 %v1097
    %v1440 = vunpack.c.h.b16 %v1097
    %v1441 = vunpack.c.l.b16 %v1098
    %v1442 = vunpack.c.h.b16 %v1098
    %v1443 = vunpack.c.l.b16 %v1099
    %v1444 = vunpack.c.h.b16 %v1099
    %v1445 = vunpack.c.l.b16 %v1100
    %v1446 = vunpack.c.h.b16 %v1100
    %v1447 = vunpack.c.l.b16 %v1101
    %v1448 = vunpack.c.h.b16 %v1101
    %v1449 = vunpack.c.l.b16 %v1102
    %v1450 = vunpack.c.h.b16 %v1102
    %v1451 = vunpack.c.l.b16 %v1103
    %v1452 = vunpack.c.h.b16 %v1103
    %v1453 = vunpack.c.l.b16 %v1104
    %v1454 = vunpack.c.h.b16 %v1104
    %v1455 = vunpack.c.l.b16 %v1105
    %v1456 = vunpack.c.h.b16 %v1105
    %v1457 = vunpack.c.l.b16 %v1106
    %v1458 = vunpack.c.h.b16 %v1106
    %v1459 = vunpack.c.l.b16 %v1107
    %v1460 = vunpack.c.h.b16 %v1107
    %v1461 = vunpack.c.l.b16 %v1108
    %v1462 = vunpack.c.h.b16 %v1108
    %v1463 = vunpack.c.l.b16 %v1109
    %v1464 = vunpack.c.h.b16 %v1109
    %v1465 = vunpack.c.l.b16 %v1110
    %v1466 = vunpack.c.h.b16 %v1110
    %v1467 = vunpack.c.l.b16 %v1111
    %v1468 = vunpack.c.h.b16 %v1111
    %v1469 = vunpack.c.l.b16 %v1112
    %v1470 = vunpack.c.h.b16 %v1112
    %v1471 = vunpack.c.l.b16 %v1113
    %v1472 = vunpack.c.h.b16 %v1113
    %v1473 = vunpack.c.l.b16 %v1114
    %v1474 = vunpack.c.h.b16 %v1114
    %v1475 = vunpack.c.l.b16 %v1115
    %v1476 = vunpack.c.h.b16 %v1115
    %v1477 = vunpack.c.l.b16 %v1116
    %v1478 = vunpack.c.h.b16 %v1116
    %v1479 = vunpack.c.l.b16 %v1117
    %v1480 = vunpack.c.h.b16 %v1117
    %v1481 = vunpack.c.l.b16 %v1118
    %v1482 = vunpack.c.h.b16 %v1118
    %v1483 = vunpack.c.l.b16 %v1119
    %v1484 = vunpack.c.h.b16 %v1119
    %v1485 = vunpack.c.l.b16 %v1120
    %v1486 = vunpack.c.h.b16 %v1120
    %v1487 = vunpack.c.l.b16 %v1121
    %v1488 = vunpack.c.h.b16 %v1121
    %v1489 = vunpack.c.l.b16 %v1122
    %v1490 = vunpack.c.h.b16 %v1122
    %v1491 = vunpack.c.l.b16 %v1123
    %v1492 = vunpack.c.h.b16 %v1123
    %v1493 = vunpack.c.l.b16 %v1124
    %v1494 = vunpack.c.h.b16 %v1124
    %v1495 = vunpack.c.l.b16 %v1125
    %v1496 = vunpack.c.h.b16 %v1125
    %v1497 = vunpack.c.l.b16 %v1126
    %v1498 = vunpack.c.h.b16 %v1126
    %v1499 = vunpack.c.l.b16 %v1127
    %v1500 = vunpack.c.h.b16 %v1127
    %v1501 = vunpack.c.l.b16 %v1128
    %v1502 = vunpack.c.h.b16 %v1128
    %v1503 = vunpack.c.l.b16 %v1129
    %v1504 = vunpack.c.h.b16 %v1129
    %v1505 = vunpack.c.l.b16 %v1130
    %v1506 = vunpack.c.h.b16 %v1130
    %v1507 = vunpack.c.l.b16 %v1131
    %v1508 = vunpack.c.h.b16 %v1131
    %v1509 = vunpack.c.l.b16 %v1132
    %v1510 = vunpack.c.h.b16 %v1132
    %v1511 = vunpack.c.l.b16 %v1133
    %v1512 = vunpack.c.h.b16 %v1133
    %v1513 = vunpack.c.l.b16 %v1134
    %v1514 = vunpack.c.h.b16 %v1134
    %v1515 = vunpack.c.l.b16 %v1135
    %v1516 = vunpack.c.h.b16 %v1135
    %v1517 = vunpack.c.l.b16 %v1136
    %v1518 = vunpack.c.h.b16 %v1136
    %v1519 = vunpack.c.l.b16 %v1137
    %v1520 = vunpack.c.h.b16 %v1137
    %v1521 = vunpack.c.l.b16 %v1138
    %v1522 = vunpack.c.h.b16 %v1138
    %v1523 = vunpack.c.l.b16 %v1139
    %v1524 = vunpack.c.h.b16 %v1139
    %v1525 = vunpack.c.l.b16 %v1140
    %v1526 = vunpack.c.h.b16 %v1140
    %v1527 = vunpack.c.l.b16 %v1141
    %v1528 = vunpack.c.h.b16 %v1141
    %v1529 = vunpack.c.l.b16 %v1142
    %v1530 = vunpack.c.h.b16 %v1142
    %v1531 = vunpack.c.l.b16 %v1143
    %v1532 = vunpack.c.h.b16 %v1143
    %v1533 = vunpack.c.l.b16 %v1144
    %v1534 = vunpack.c.h.b16 %v1144
    %v1535 = vunpack.c.l.b16 %v1145
    %v1536 = vunpack.c.h.b16 %v1145
    %v1537 = vunpack.c.l.b16 %v1146
    %v1538 = vunpack.c.h.b16 %v1146
    %v1539 = vunpack.c.l.b16 %v1147
    %v1540 = vunpack.c.h.b16 %v1147
    %v1541 = vunpack.c.l.b16 %v1148
    %v1542 = vunpack.c.h.b16 %v1148
    %v1543 = vunpack.c.l.b16 %v1149
    %v1544 = vunpack.c.h.b16 %v1149
    %v1545 = vunpack.c.l.b16 %v1150
    %v1546 = vunpack.c.h.b16 %v1150
    %v1547 = vunpack.c.l.b16 %v1151
    %v1548 = vunpack.c.h.b16 %v1151
    %v1549 = vunpack.c.l.b16 %v1152
    %v1550 = vunpack.c.h.b16 %v1152
    %v1551 = vunpack.c.l.b16 %v1153
    %v1552 = vunpack.c.h.b16 %v1153
    %v1553 = vunpack.c.l.b16 %v1154
    %v1554 = vunpack.c.h.b16 %v1154
    %v1555 = vunpack.c.l.b16 %v1155
    %v1556 = vunpack.c.h.b16 %v1155
    %v1557 = vunpack.c.l.b16 %v1156
    %v1558 = vunpack.c.h.b16 %v1156
    %v1559 = vunpack.c.l.b16 %v1157
    %v1560 = vunpack.c.h.b16 %v1157
    %v1561 = vunpack.c.l.b16 %v1158
    %v1562 = vunpack.c.h.b16 %v1158
    %v1563 = vunpack.c.l.b16 %v1159
    %v1564 = vunpack.c.h.b16 %v1159
    %v1565 = vunpack.c.l.b16 %v1160
    %v1566 = vunpack.c.h.b16 %v1160
    %v1567 = vpack.c.b16 %v1315, %v1311
    %v1568 = vpack.c.b16 %v1316, %v1312
    %v1569 = vpack.c.b16 %v1317, %v1313
    %v1570 = vpack.c.b16 %v1318, %v1314
    %v1571 = vpack.c.b16 %v1323, %v1319
    %v1572 = vpack.c.b16 %v1324, %v1320
    %v1573 = vpack.c.b16 %v1325, %v1321
    %v1574 = vpack.c.b16 %v1326, %v1322
    %v1575 = vpack.c.b16 %v1331, %v1327
    %v1576 = vpack.c.b16 %v1332, %v1328
    %v1577 = vpack.c.b16 %v1333, %v1329
    %v1578 = vpack.c.b16 %v1334, %v1330
    %v1579 = vpack.c.b16 %v1339, %v1335
    %v1580 = vpack.c.b16 %v1340, %v1336
    %v1581 = vpack.c.b16 %v1341, %v1337
    %v1582 = vpack.c.b16 %v1342, %v1338
    %v1583 = vpack.c.b16 %v1347, %v1343
    %v1584 = vpack.c.b16 %v1348, %v1344
    %v1585 = vpack.c.b16 %v1349, %v1345
    %v1586 = vpack.c.b16 %v1350, %v1346
    %v1587 = vpack.c.b16 %v1355, %v1351
    %v1588 = vpack.c.b16 %v1356, %v1352
    %v1589 = vpack.c.b16 %v1357, %v1353
    %v1590 = vpack.c.b16 %v1358, %v1354
    %v1591 = vpack.c.b16 %v1363, %v1359
    %v1592 = vpack.c.b16 %v1364, %v1360
    %v1593 = vpack.c.b16 %v1365, %v1361
    %v1594 = vpack.c.b16 %v1366, %v1362
    %v1595 = vpack.c.b16 %v1371, %v1367
    %v1596 = vpack.c.b16 %v1372, %v1368
    %v1597 = vpack.c.b16 %v1373, %v1369
    %v1598 = vpack.c.b16 %v1374, %v1370
    %v1599 = vpack.c.b16 %v1379, %v1375
    %v1600 = vpack.c.b16 %v1380, %v1376
    %v1601 = vpack.c.b16 %v1381, %v1377
    %v1602 = vpack.c.b16 %v1382, %v1378
    %v1603 = vpack.c.b16 %v1387, %v1383
    %v1604 = vpack.c.b16 %v1388, %v1384
    %v1605 = vpack.c.b16 %v1389, %v1385
    %v1606 = vpack.c.b16 %v1390, %v1386
    %v1607 = vpack.c.b16 %v1395, %v1391
    %v1608 = vpack.c.b16 %v1396, %v1392
    %v1609 = vpack.c.b16 %v1397, %v1393
    %v1610 = vpack.c.b16 %v1398, %v1394
    %v1611 = vpack.c.b16 %v1403, %v1399
    %v1612 = vpack.c.b16 %v1404, %v1400
    %v1613 = vpack.c.b16 %v1405, %v1401
    %v1614 = vpack.c.b16 %v1406, %v1402
    %v1615 = vpack.c.b16 %v1411, %v1407
    %v1616 = vpack.c.b16 %v1412, %v1408
    %v1617 = vpack.c.b16 %v1413, %v1409
    %v1618 = vpack.c.b16 %v1414, %v1410
    %v1619 = vpack.c.b16 %v1419, %v1415
    %v1620 = vpack.c.b16 %v1420, %v1416
    %v1621 = vpack.c.b16 %v1421, %v1417
    %v1622 = vpack.c.b16 %v1422, %v1418
    %v1623 = vpack.c.b16 %v1427, %v1423
    %v1624 = vpack.c.b16 %v1428, %v1424
    %v1625 = vpack.c.b16 %v1429, %v1425
    %v1626 = vpack.c.b16 %v1430, %v1426
    %v1627 = vpack.c.b16 %v1435, %v1431
    %v1628 = vpack.c.b16 %v1436, %v1432
    %v1629 = vpack.c.b16 %v1437, %v1433
    %v1630 = vpack.c.b16 %v1438, %v1434
    %v1631 = vpack.c.b16 %v1443, %v1439
    %v1632 = vpack.c.b16 %v1444, %v1440
    %v1633 = vpack.c.b16 %v1445, %v1441
    %v1634 = vpack.c.b16 %v1446, %v1442
    %v1635 = vpack.c.b16 %v1451, %v1447
    %v1636 = vpack.c.b16 %v1452, %v1448
    %v1637 = vpack.c.b16 %v1453, %v1449
    %v1638 = vpack.c.b16 %v1454, %v1450
    %v1639 = vpack.c.b16 %v1459, %v1455
    %v1640 = vpack.c.b16 %v1460, %v1456
    %v1641 = vpack.c.b16 %v1461, %v1457
    %v1642 = vpack.c.b16 %v1462, %v1458
    %v1643 = vpack.c.b16 %v1467, %v1463
    %v1644 = vpack.c.b16 %v1468, %v1464
    %v1645 = vpack.c.b16 %v1469, %v1465
    %v1646 = vpack.c.b16 %v1470, %v1466
    %v1647 = vpack.c.b16 %v1475, %v1471
    %v1648 = vpack.c.b16 %v1476, %v1472
    %v1649 = vpack.c.b16 %v1477, %v1473
    %v1650 = vpack.c.b16 %v1478, %v1474
    %v1651 = vpack.c.b16 %v1483, %v1479
    %v1652 = vpack.c.b16 %v1484, %v1480
    %v1653 = vpack.c.b16 %v1485, %v1481
    %v1654 = vpack.c.b16 %v1486, %v1482
    %v1655 = vpack.c.b16 %v1491, %v1487
    %v1656 = vpack.c.b16 %v1492, %v1488
    %v1657 = vpack.c.b16 %v1493, %v1489
    %v1658 = vpack.c.b16 %v1494, %v1490
    %v1659 = vpack.c.b16 %v1499, %v1495
    %v1660 = vpack.c.b16 %v1500, %v1496
    %v1661 = vpack.c.b16 %v1501, %v1497
    %v1662 = vpack.c.b16 %v1502, %v1498
    %v1663 = vpack.c.b16 %v1507, %v1503
    %v1664 = vpack.c.b16 %v1508, %v1504
    %v1665 = vpack.c.b16 %v1509, %v1505
    %v1666 = vpack.c.b16 %v1510, %v1506
    %v1667 = vpack.c.b16 %v1515, %v1511
    %v1668 = vpack.c.b16 %v1516, %v1512
    %v1669 = vpack.c.b16 %v1517, %v1513
    %v1670 = vpack.c.b16 %v1518, %v1514
    %v1671 = vpack.c.b16 %v1523, %v1519
    %v1672 = vpack.c.b16 %v1524, %v1520
    %v1673 = vpack.c.b16 %v1525, %v1521
    %v1674 = vpack.c.b16 %v1526, %v1522
    %v1675 = vpack.c.b16 %v1531, %v1527
    %v1676 = vpack.c.b16 %v1532, %v1528
    %v1677 = vpack.c.b16 %v1533, %v1529
    %v1678 = vpack.c.b16 %v1534, %v1530
    %v1679 = vpack.c.b16 %v1539, %v1535
    %v1680 = vpack.c.b16 %v1540, %v1536
    %v1681 = vpack.c.b16 %v1541, %v1537
    %v1682 = vpack.c.b16 %v1542, %v1538
    %v1683 = vpack.c.b16 %v1547, %v1543
    %v1684 = vpack.c.b16 %v1548, %v1544
    %v1685 = vpack.c.b16 %v1549, %v1545
    %v1686 = vpack.c.b16 %v1550, %v1546
    %v1687 = vpack.c.b16 %v1555, %v1551
    %v1688 = vpack.c.b16 %v1556, %v1552
    %v1689 = vpack.c.b16 %v1557, %v1553
    %v1690 = vpack.c.b16 %v1558, %v1554
    %v1691 = vpack.c.b16 %v1563, %v1559
    %v1692 = vpack.c.b16 %v1564, %v1560
    %v1693 = vpack.c.b16 %v1565, %v1561
    %v1694 = vpack.c.b16 %v1566, %v1562
    %1823 = vmatprep.subr.bf16.mxu0 %v1568
    %1824 = vmatpush1.bf16.msra.mxu0 %v1567
    %1825 = vmatprep.subr.bf16.mxu0 %v1572
    %1826 = vmatpush1.bf16.msra.mxu0 %v1571
    %1827 = vmatprep.subr.bf16.mxu0 %v1576
    %1828 = vmatpush1.bf16.msra.mxu0 %v1575
    %1829 = vmatprep.subr.bf16.mxu0 %v1580
    %1830 = vmatpush1.bf16.msra.mxu0 %v1579
    %1831 = vmatprep.subr.bf16.mxu0 %v1584
    %1832 = vmatpush1.bf16.msra.mxu0 %v1583
    %1833 = vmatprep.subr.bf16.mxu0 %v1588
    %1834 = vmatpush1.bf16.msra.mxu0 %v1587
    %1835 = vmatprep.subr.bf16.mxu0 %v1592
    %1836 = vmatpush1.bf16.msra.mxu0 %v1591
    %1837 = vmatprep.subr.bf16.mxu0 %v1596
    %1838 = vmatpush1.bf16.msra.mxu0 %v1595
    %1839 = vmatprep.subr.bf16.mxu0 %v1600
    %1840 = vmatpush1.bf16.msra.mxu0 %v1599
    %1841 = vmatprep.subr.bf16.mxu0 %v1604
    %1842 = vmatpush1.bf16.msra.mxu0 %v1603
    %1843 = vmatprep.subr.bf16.mxu0 %v1608
    %1844 = vmatpush1.bf16.msra.mxu0 %v1607
    %1845 = vmatprep.subr.bf16.mxu0 %v1612
    %1846 = vmatpush1.bf16.msra.mxu0 %v1611
    %1847 = vmatprep.subr.bf16.mxu0 %v1616
    %1848 = vmatpush1.bf16.msra.mxu0 %v1615
    %1849 = vmatprep.subr.bf16.mxu0 %v1620
    %1850 = vmatpush1.bf16.msra.mxu0 %v1619
    %1851 = vmatprep.subr.bf16.mxu0 %v1624
    %1852 = vmatpush1.bf16.msra.mxu0 %v1623
    %1853 = vmatprep.subr.bf16.mxu0 %v1628
    %1854 = vmatpush1.bf16.msra.mxu0 %v1627
    %1855 = vmatprep.mubr.bf16.mxu0 %v1030
    %1856 = vmatmul.mubr.bf16.gmra.mrb[0].mxu0 %v1029
    %v1857 = vpop.f32.mrb[0].mxu0
    %v1858 = vadd.f32 %v1166, %v1857
    %v1859 = vpop.f32.mrb[0].mxu0
    %v1860 = vadd.f32 %v1170, %v1859
    %v1861 = vpop.f32.mrb[0].mxu0
    %v1862 = vpop.f32.mrb[0].mxu0
    %1863 = vdwg.mxu0
    %1864 = vmatprep.subr.bf16.mxu0 %v1632
    %1865 = vmatpush1.bf16.msra.mxu0 %v1631
    %1866 = vmatprep.subr.bf16.mxu0 %v1636
    %1867 = vmatpush1.bf16.msra.mxu0 %v1635
    %1868 = vmatprep.subr.bf16.mxu0 %v1640
    %1869 = vmatpush1.bf16.msra.mxu0 %v1639
    %1870 = vmatprep.subr.bf16.mxu0 %v1644
    %1871 = vmatpush1.bf16.msra.mxu0 %v1643
    %1872 = vmatprep.subr.bf16.mxu0 %v1648
    %1873 = vmatpush1.bf16.msra.mxu0 %v1647
    %1874 = vmatprep.subr.bf16.mxu0 %v1652
    %1875 = vmatpush1.bf16.msra.mxu0 %v1651
    %1876 = vmatprep.subr.bf16.mxu0 %v1656
    %1877 = vmatpush1.bf16.msra.mxu0 %v1655
    %1878 = vmatprep.subr.bf16.mxu0 %v1660
    %1879 = vmatpush1.bf16.msra.mxu0 %v1659
    %1880 = vmatprep.subr.bf16.mxu0 %v1664
    %1881 = vmatpush1.bf16.msra.mxu0 %v1663
    %1882 = vmatprep.subr.bf16.mxu0 %v1668
    %1883 = vmatpush1.bf16.msra.mxu0 %v1667
    %1884 = vmatprep.subr.bf16.mxu0 %v1672
    %1885 = vmatpush1.bf16.msra.mxu0 %v1671
    %1886 = vmatprep.subr.bf16.mxu0 %v1676
    %1887 = vmatpush1.bf16.msra.mxu0 %v1675
    %1888 = vmatprep.subr.bf16.mxu0 %v1680
    %1889 = vmatpush1.bf16.msra.mxu0 %v1679
    %1890 = vmatprep.subr.bf16.mxu0 %v1684
    %1891 = vmatpush1.bf16.msra.mxu0 %v1683
    %1892 = vmatprep.subr.bf16.mxu0 %v1688
    %1893 = vmatpush1.bf16.msra.mxu0 %v1687
    %1894 = vmatprep.subr.bf16.mxu0 %v1692
    %1895 = vmatpush1.bf16.msra.mxu0 %v1691
    %1896 = vmatprep.mubr.bf16.mxu0 %v1032
    %1897 = vmatmul.mubr.bf16.gmra.mrb[0].mxu0 %v1031
    %v1898 = vpop.f32.mrb[0].mxu0
    %v1899 = vadd.f32 %v1858, %v1898
    %v1900 = vpop.f32.mrb[0].mxu0
    %v1901 = vadd.f32 %v1860, %v1900
    %v1902 = vpop.f32.mrb[0].mxu0
    %v1903 = vpop.f32.mrb[0].mxu0
    %1904 = vdwg.mxu0
    %1905 = vmatprep.subr.bf16.mxu0 %v1570
    %1906 = vmatpush1.bf16.msra.mxu0 %v1569
    %1907 = vmatprep.subr.bf16.mxu0 %v1574
    %1908 = vmatpush1.bf16.msra.mxu0 %v1573
    %1909 = vmatprep.subr.bf16.mxu0 %v1578
    %1910 = vmatpush1.bf16.msra.mxu0 %v1577
    %1911 = vmatprep.subr.bf16.mxu0 %v1582
    %1912 = vmatpush1.bf16.msra.mxu0 %v1581
    %1913 = vmatprep.subr.bf16.mxu0 %v1586
    %1914 = vmatpush1.bf16.msra.mxu0 %v1585
    %1915 = vmatprep.subr.bf16.mxu0 %v1590
    %1916 = vmatpush1.bf16.msra.mxu0 %v1589
    %1917 = vmatprep.subr.bf16.mxu0 %v1594
    %1918 = vmatpush1.bf16.msra.mxu0 %v1593
    %1919 = vmatprep.subr.bf16.mxu0 %v1598
    %1920 = vmatpush1.bf16.msra.mxu0 %v1597
    %1921 = vmatprep.subr.bf16.mxu0 %v1602
    %1922 = vmatpush1.bf16.msra.mxu0 %v1601
    %1923 = vmatprep.subr.bf16.mxu0 %v1606
    %1924 = vmatpush1.bf16.msra.mxu0 %v1605
    %1925 = vmatprep.subr.bf16.mxu0 %v1610
    %1926 = vmatpush1.bf16.msra.mxu0 %v1609
    %1927 = vmatprep.subr.bf16.mxu0 %v1614
    %1928 = vmatpush1.bf16.msra.mxu0 %v1613
    %1929 = vmatprep.subr.bf16.mxu0 %v1618
    %1930 = vmatpush1.bf16.msra.mxu0 %v1617
    %1931 = vmatprep.subr.bf16.mxu0 %v1622
    %1932 = vmatpush1.bf16.msra.mxu0 %v1621
    %1933 = vmatprep.subr.bf16.mxu0 %v1626
    %1934 = vmatpush1.bf16.msra.mxu0 %v1625
    %1935 = vmatprep.subr.bf16.mxu0 %v1630
    %1936 = vmatpush1.bf16.msra.mxu0 %v1629
    %1937 = vmatprep.mubr.bf16.mxu0 %v1030
    %1938 = vmatmul.mubr.bf16.gmra.mrb[0].mxu0 %v1029
    %v1939 = vpop.f32.mrb[0].mxu0
    %v1940 = vadd.f32 %v1174, %v1939
    %v1941 = vpop.f32.mrb[0].mxu0
    %v1942 = vadd.f32 %v1178, %v1941
    %v1943 = vpop.f32.mrb[0].mxu0
    %v1944 = vpop.f32.mrb[0].mxu0
    %1945 = vdwg.mxu0
    %1946 = vmatprep.subr.bf16.mxu0 %v1634
    %1947 = vmatpush1.bf16.msra.mxu0 %v1633
    %1948 = vmatprep.subr.bf16.mxu0 %v1638
    %1949 = vmatpush1.bf16.msra.mxu0 %v1637
    %1950 = vmatprep.subr.bf16.mxu0 %v1642
    %1951 = vmatpush1.bf16.msra.mxu0 %v1641
    %1952 = vmatprep.subr.bf16.mxu0 %v1646
    %1953 = vmatpush1.bf16.msra.mxu0 %v1645
    %1954 = vmatprep.subr.bf16.mxu0 %v1650
    %1955 = vmatpush1.bf16.msra.mxu0 %v1649
    %1956 = vmatprep.subr.bf16.mxu0 %v1654
    %1957 = vmatpush1.bf16.msra.mxu0 %v1653
    %1958 = vmatprep.subr.bf16.mxu0 %v1658
    %1959 = vmatpush1.bf16.msra.mxu0 %v1657
    %1960 = vmatprep.subr.bf16.mxu0 %v1662
    %1961 = vmatpush1.bf16.msra.mxu0 %v1661
    %1962 = vmatprep.subr.bf16.mxu0 %v1666
    %1963 = vmatpush1.bf16.msra.mxu0 %v1665
    %1964 = vmatprep.subr.bf16.mxu0 %v1670
    %1965 = vmatpush1.bf16.msra.mxu0 %v1669
    %1966 = vmatprep.subr.bf16.mxu0 %v1674
    %1967 = vmatpush1.bf16.msra.mxu0 %v1673
    %1968 = vmatprep.subr.bf16.mxu0 %v1678
    %1969 = vmatpush1.bf16.msra.mxu0 %v1677
    %1970 = vmatprep.subr.bf16.mxu0 %v1682
    %1971 = vmatpush1.bf16.msra.mxu0 %v1681
    %1972 = vmatprep.subr.bf16.mxu0 %v1686
    %1973 = vmatpush1.bf16.msra.mxu0 %v1685
    %1974 = vmatprep.subr.bf16.mxu0 %v1690
    %1975 = vmatpush1.bf16.msra.mxu0 %v1689
    %1976 = vmatprep.subr.bf16.mxu0 %v1694
    %1977 = vmatpush1.bf16.msra.mxu0 %v1693
    %1978 = vmatprep.mubr.bf16.mxu0 %v1032
    %1979 = vmatmul.mubr.bf16.gmra.mrb[0].mxu0 %v1031
    %v1980 = vpop.f32.mrb[0].mxu0
    %v1981 = vadd.f32 %v1940, %v1980
    %v1982 = vpop.f32.mrb[0].mxu0
    %v1983 = vadd.f32 %v1942, %v1982
    %v1984 = vpop.f32.mrb[0].mxu0
    %v1985 = vpop.f32.mrb[0].mxu0
    %1986 = vdwg.mxu0
    %v1987 = vmax.f32 %v1899, 0.0
    %v1988 = vmax.f32 %v1901, 0.0
    %v1989 = vmax.f32 %v1981, 0.0
    %v1990 = vmax.f32 %v1983, 0.0
    %v1991 = vpack.c.bf16 %v1987, %v1987
    %v1992 = vpack.c.bf16 %v1988, %v1988
    %v1993 = vpack.c.bf16 %v1989, %v1989
    %v1994 = vpack.c.bf16 %v1990, %v1990
    %v1995 = vld [vmem:[%s5] sm:$0xf]
    %v1996 = vld [vmem:[%s5 + $0x4] sm:$0xf]
    %v1997 = vld [vmem:[%s5 + $0x8] sm:$0xf]
    %v1998 = vld [vmem:[%s5 + $0xc] sm:$0xf]
    %v1999 = vld [vmem:[%s5 + $0x10] sm:$0xf]
    %v2000 = vld [vmem:[%s5 + $0x14] sm:$0xf]
    %v2001 = vld [vmem:[%s5 + $0x18] sm:$0xf]
    %v2002 = vld [vmem:[%s5 + $0x1c] sm:$0xf]
    %v2003 = vld [vmem:[%s5 + $0x20] sm:$0xf]
    %v2004 = vld [vmem:[%s5 + $0x24] sm:$0xf]
    %v2005 = vld [vmem:[%s5 + $0x28] sm:$0xf]
    %v2006 = vld [vmem:[%s5 + $0x2c] sm:$0xf]
    %v2007 = vld [vmem:[%s5 + $0x30] sm:$0xf]
    %v2008 = vld [vmem:[%s5 + $0x34] sm:$0xf]
    %v2009 = vld [vmem:[%s5 + $0x38] sm:$0xf]
    %v2010 = vld [vmem:[%s5 + $0x3c] sm:$0xf]
    %v2011 = vld [vmem:[%s5 + $0x40] sm:$0xf]
    %v2012 = vld [vmem:[%s5 + $0x44] sm:$0xf]
    %v2013 = vld [vmem:[%s5 + $0x48] sm:$0xf]
    %v2014 = vld [vmem:[%s5 + $0x4c] sm:$0xf]
    %v2015 = vld [vmem:[%s5 + $0x50] sm:$0xf]
    %v2016 = vld [vmem:[%s5 + $0x54] sm:$0xf]
    %v2017 = vld [vmem:[%s5 + $0x58] sm:$0xf]
    %v2018 = vld [vmem:[%s5 + $0x5c] sm:$0xf]
    %v2019 = vld [vmem:[%s5 + $0x60] sm:$0xf]
    %v2020 = vld [vmem:[%s5 + $0x64] sm:$0xf]
    %v2021 = vld [vmem:[%s5 + $0x68] sm:$0xf]
    %v2022 = vld [vmem:[%s5 + $0x6c] sm:$0xf]
    %v2023 = vld [vmem:[%s5 + $0x70] sm:$0xf]
    %v2024 = vld [vmem:[%s5 + $0x74] sm:$0xf]
    %v2025 = vld [vmem:[%s5 + $0x78] sm:$0xf]
    %v2026 = vld [vmem:[%s5 + $0x7c] sm:$0xf]
    %v2027 = vld [vmem:[%s5 + $0x80] sm:$0xf]
    %v2028 = vld [vmem:[%s5 + $0x84] sm:$0xf]
    %v2029 = vld [vmem:[%s5 + $0x88] sm:$0xf]
    %v2030 = vld [vmem:[%s5 + $0x8c] sm:$0xf]
    %v2031 = vld [vmem:[%s5 + $0x90] sm:$0xf]
    %v2032 = vld [vmem:[%s5 + $0x94] sm:$0xf]
    %v2033 = vld [vmem:[%s5 + $0x98] sm:$0xf]
    %v2034 = vld [vmem:[%s5 + $0x9c] sm:$0xf]
    %v2035 = vld [vmem:[%s5 + $0xa0] sm:$0xf]
    %v2036 = vld [vmem:[%s5 + $0xa4] sm:$0xf]
    %v2037 = vld [vmem:[%s5 + $0xa8] sm:$0xf]
    %v2038 = vld [vmem:[%s5 + $0xac] sm:$0xf]
    %v2039 = vld [vmem:[%s5 + $0xb0] sm:$0xf]
    %v2040 = vld [vmem:[%s5 + $0xb4] sm:$0xf]
    %v2041 = vld [vmem:[%s5 + $0xb8] sm:$0xf]
    %v2042 = vld [vmem:[%s5 + $0xbc] sm:$0xf]
    %v2043 = vld [vmem:[%s5 + $0xc0] sm:$0xf]
    %v2044 = vld [vmem:[%s5 + $0xc4] sm:$0xf]
    %v2045 = vld [vmem:[%s5 + $0xc8] sm:$0xf]
    %v2046 = vld [vmem:[%s5 + $0xcc] sm:$0xf]
    %v2047 = vld [vmem:[%s5 + $0xd0] sm:$0xf]
    %v2048 = vld [vmem:[%s5 + $0xd4] sm:$0xf]
    %v2049 = vld [vmem:[%s5 + $0xd8] sm:$0xf]
    %v2050 = vld [vmem:[%s5 + $0xdc] sm:$0xf]
    %v2051 = vld [vmem:[%s5 + $0xe0] sm:$0xf]
    %v2052 = vld [vmem:[%s5 + $0xe4] sm:$0xf]
    %v2053 = vld [vmem:[%s5 + $0xe8] sm:$0xf]
    %v2054 = vld [vmem:[%s5 + $0xec] sm:$0xf]
    %v2055 = vld [vmem:[%s5 + $0xf0] sm:$0xf]
    %v2056 = vld [vmem:[%s5 + $0xf4] sm:$0xf]
    %v2057 = vld [vmem:[%s5 + $0xf8] sm:$0xf]
    %v2058 = vld [vmem:[%s5 + $0xfc] sm:$0xf]
    %v2059 = vld [vmem:[%s6] sm:$0x1]
    %v2061 = vlaneseq
    %v2062 = vshrl.u32 %v2061, 7
    %v2063 = vsub.s32 0, %v2062
    %v2064 = vrot.slane %v2059, %v2063
    %v2130 = vunpack.c.l.b16 %v1995
    %v2131 = vunpack.c.l.b16 %v1996
    %v2132 = vunpack.c.l.b16 %v1997
    %v2133 = vunpack.c.l.b16 %v1998
    %v2134 = vunpack.c.l.b16 %v1999
    %v2135 = vunpack.c.l.b16 %v2000
    %v2136 = vunpack.c.l.b16 %v2001
    %v2137 = vunpack.c.l.b16 %v2002
    %v2138 = vunpack.c.l.b16 %v2003
    %v2139 = vunpack.c.l.b16 %v2004
    %v2140 = vunpack.c.l.b16 %v2005
    %v2141 = vunpack.c.l.b16 %v2006
    %v2142 = vunpack.c.l.b16 %v2007
    %v2143 = vunpack.c.l.b16 %v2008
    %v2144 = vunpack.c.l.b16 %v2009
    %v2145 = vunpack.c.l.b16 %v2010
    %v2146 = vunpack.c.l.b16 %v2011
    %v2147 = vunpack.c.l.b16 %v2012
    %v2148 = vunpack.c.l.b16 %v2013
    %v2149 = vunpack.c.l.b16 %v2014
    %v2150 = vunpack.c.l.b16 %v2015
    %v2151 = vunpack.c.l.b16 %v2016
    %v2152 = vunpack.c.l.b16 %v2017
    %v2153 = vunpack.c.l.b16 %v2018
    %v2154 = vunpack.c.l.b16 %v2019
    %v2155 = vunpack.c.l.b16 %v2020
    %v2156 = vunpack.c.l.b16 %v2021
    %v2157 = vunpack.c.l.b16 %v2022
    %v2158 = vunpack.c.l.b16 %v2023
    %v2159 = vunpack.c.l.b16 %v2024
    %v2160 = vunpack.c.l.b16 %v2025
    %v2161 = vunpack.c.l.b16 %v2026
    %v2162 = vunpack.c.l.b16 %v2027
    %v2163 = vunpack.c.l.b16 %v2028
    %v2164 = vunpack.c.l.b16 %v2029
    %v2165 = vunpack.c.l.b16 %v2030
    %v2166 = vunpack.c.l.b16 %v2031
    %v2167 = vunpack.c.l.b16 %v2032
    %v2168 = vunpack.c.l.b16 %v2033
    %v2169 = vunpack.c.l.b16 %v2034
    %v2170 = vunpack.c.l.b16 %v2035
    %v2171 = vunpack.c.l.b16 %v2036
    %v2172 = vunpack.c.l.b16 %v2037
    %v2173 = vunpack.c.l.b16 %v2038
    %v2174 = vunpack.c.l.b16 %v2039
    %v2175 = vunpack.c.l.b16 %v2040
    %v2176 = vunpack.c.l.b16 %v2041
    %v2177 = vunpack.c.l.b16 %v2042
    %v2178 = vunpack.c.l.b16 %v2043
    %v2179 = vunpack.c.l.b16 %v2044
    %v2180 = vunpack.c.l.b16 %v2045
    %v2181 = vunpack.c.l.b16 %v2046
    %v2182 = vunpack.c.l.b16 %v2047
    %v2183 = vunpack.c.l.b16 %v2048
    %v2184 = vunpack.c.l.b16 %v2049
    %v2185 = vunpack.c.l.b16 %v2050
    %v2186 = vunpack.c.l.b16 %v2051
    %v2187 = vunpack.c.l.b16 %v2052
    %v2188 = vunpack.c.l.b16 %v2053
    %v2189 = vunpack.c.l.b16 %v2054
    %v2190 = vunpack.c.l.b16 %v2055
    %v2191 = vunpack.c.l.b16 %v2056
    %v2192 = vunpack.c.l.b16 %v2057
    %v2193 = vunpack.c.l.b16 %v2058
    %v2194 = vpack.c.b16 %v2131, %v2130
    %v2195 = vpack.c.b16 %v2133, %v2132
    %v2196 = vpack.c.b16 %v2135, %v2134
    %v2197 = vpack.c.b16 %v2137, %v2136
    %v2198 = vpack.c.b16 %v2139, %v2138
    %v2199 = vpack.c.b16 %v2141, %v2140
    %v2200 = vpack.c.b16 %v2143, %v2142
    %v2201 = vpack.c.b16 %v2145, %v2144
    %v2202 = vpack.c.b16 %v2147, %v2146
    %v2203 = vpack.c.b16 %v2149, %v2148
    %v2204 = vpack.c.b16 %v2151, %v2150
    %v2205 = vpack.c.b16 %v2153, %v2152
    %v2206 = vpack.c.b16 %v2155, %v2154
    %v2207 = vpack.c.b16 %v2157, %v2156
    %v2208 = vpack.c.b16 %v2159, %v2158
    %v2209 = vpack.c.b16 %v2161, %v2160
    %v2210 = vpack.c.b16 %v2163, %v2162
    %v2211 = vpack.c.b16 %v2165, %v2164
    %v2212 = vpack.c.b16 %v2167, %v2166
    %v2213 = vpack.c.b16 %v2169, %v2168
    %v2214 = vpack.c.b16 %v2171, %v2170
    %v2215 = vpack.c.b16 %v2173, %v2172
    %v2216 = vpack.c.b16 %v2175, %v2174
    %v2217 = vpack.c.b16 %v2177, %v2176
    %v2218 = vpack.c.b16 %v2179, %v2178
    %v2219 = vpack.c.b16 %v2181, %v2180
    %v2220 = vpack.c.b16 %v2183, %v2182
    %v2221 = vpack.c.b16 %v2185, %v2184
    %v2222 = vpack.c.b16 %v2187, %v2186
    %v2223 = vpack.c.b16 %v2189, %v2188
    %v2224 = vpack.c.b16 %v2191, %v2190
    %v2225 = vpack.c.b16 %v2193, %v2192
    %2258 = vmatprep.subr.bf16.mxu0 0
    %2259 = vmatpush1.bf16.msra.mxu0 %v2194
    %2260 = vmatprep.subr.bf16.mxu0 0
    %2261 = vmatpush1.bf16.msra.mxu0 %v2195
    %2262 = vmatprep.subr.bf16.mxu0 0
    %2263 = vmatpush1.bf16.msra.mxu0 %v2196
    %2264 = vmatprep.subr.bf16.mxu0 0
    %2265 = vmatpush1.bf16.msra.mxu0 %v2197
    %2266 = vmatprep.subr.bf16.mxu0 0
    %2267 = vmatpush1.bf16.msra.mxu0 %v2198
    %2268 = vmatprep.subr.bf16.mxu0 0
    %2269 = vmatpush1.bf16.msra.mxu0 %v2199
    %2270 = vmatprep.subr.bf16.mxu0 0
    %2271 = vmatpush1.bf16.msra.mxu0 %v2200
    %2272 = vmatprep.subr.bf16.mxu0 0
    %2273 = vmatpush1.bf16.msra.mxu0 %v2201
    %2274 = vmatprep.subr.bf16.mxu0 0
    %2275 = vmatpush1.bf16.msra.mxu0 %v2202
    %2276 = vmatprep.subr.bf16.mxu0 0
    %2277 = vmatpush1.bf16.msra.mxu0 %v2203
    %2278 = vmatprep.subr.bf16.mxu0 0
    %2279 = vmatpush1.bf16.msra.mxu0 %v2204
    %2280 = vmatprep.subr.bf16.mxu0 0
    %2281 = vmatpush1.bf16.msra.mxu0 %v2205
    %2282 = vmatprep.subr.bf16.mxu0 0
    %2283 = vmatpush1.bf16.msra.mxu0 %v2206
    %2284 = vmatprep.subr.bf16.mxu0 0
    %2285 = vmatpush1.bf16.msra.mxu0 %v2207
    %2286 = vmatprep.subr.bf16.mxu0 0
    %2287 = vmatpush1.bf16.msra.mxu0 %v2208
    %2288 = vmatprep.subr.bf16.mxu0 0
    %2289 = vmatpush1.bf16.msra.mxu0 %v2209
    %2290 = vmatprep.mubr.bf16.mxu0 %v1992
    %2291 = vmatmul.mubr.bf16.gmra.mrb[0].mxu0 %v1991
    %v2292 = vpop.f32.mrb[0].mxu0
    %v2293 = vadd.f32 %v2064, %v2292
    %v2294 = vpop.f32.mrb[0].mxu0
    %v2295 = vpop.f32.mrb[0].mxu0
    %v2296 = vpop.f32.mrb[0].mxu0
    %2297 = vdwg.mxu0
    %2298 = vmatprep.subr.bf16.mxu0 0
    %2299 = vmatpush1.bf16.msra.mxu0 %v2210
    %2300 = vmatprep.subr.bf16.mxu0 0
    %2301 = vmatpush1.bf16.msra.mxu0 %v2211
    %2302 = vmatprep.subr.bf16.mxu0 0
    %2303 = vmatpush1.bf16.msra.mxu0 %v2212
    %2304 = vmatprep.subr.bf16.mxu0 0
    %2305 = vmatpush1.bf16.msra.mxu0 %v2213
    %2306 = vmatprep.subr.bf16.mxu0 0
    %2307 = vmatpush1.bf16.msra.mxu0 %v2214
    %2308 = vmatprep.subr.bf16.mxu0 0
    %2309 = vmatpush1.bf16.msra.mxu0 %v2215
    %2310 = vmatprep.subr.bf16.mxu0 0
    %2311 = vmatpush1.bf16.msra.mxu0 %v2216
    %2312 = vmatprep.subr.bf16.mxu0 0
    %2313 = vmatpush1.bf16.msra.mxu0 %v2217
    %2314 = vmatprep.subr.bf16.mxu0 0
    %2315 = vmatpush1.bf16.msra.mxu0 %v2218
    %2316 = vmatprep.subr.bf16.mxu0 0
    %2317 = vmatpush1.bf16.msra.mxu0 %v2219
    %2318 = vmatprep.subr.bf16.mxu0 0
    %2319 = vmatpush1.bf16.msra.mxu0 %v2220
    %2320 = vmatprep.subr.bf16.mxu0 0
    %2321 = vmatpush1.bf16.msra.mxu0 %v2221
    %2322 = vmatprep.subr.bf16.mxu0 0
    %2323 = vmatpush1.bf16.msra.mxu0 %v2222
    %2324 = vmatprep.subr.bf16.mxu0 0
    %2325 = vmatpush1.bf16.msra.mxu0 %v2223
    %2326 = vmatprep.subr.bf16.mxu0 0
    %2327 = vmatpush1.bf16.msra.mxu0 %v2224
    %2328 = vmatprep.subr.bf16.mxu0 0
    %2329 = vmatpush1.bf16.msra.mxu0 %v2225
    %2330 = vmatprep.mubr.bf16.mxu0 %v1994
    %2331 = vmatmul.mubr.bf16.gmra.mrb[0].mxu0 %v1993
    %v2332 = vpop.f32.mrb[0].mxu0
    %v2333 = vadd.f32 %v2293, %v2332
    %v2334 = vpop.f32.mrb[0].mxu0
    %v2335 = vpop.f32.mrb[0].mxu0
    %v2336 = vpop.f32.mrb[0].mxu0
    %2337 = vdwg.mxu0
    %2338 = vst [vmem:[%s7] sm:$0xff] %v2333
    // Predicated region
    $region38: #{label_predictor.1} parent=1 // pred_check
      _
    $region39: #{label_predictor.1} parent=1 // pred_check_branch
      %2340 = sbr.rel (0) target = $region41
    $region40: #{label_predictor.1} parent=1 // pred_region
      _
    $region41: #{label_predictor.1} parent=1 // pred_fallthru
      _
    // Predicated region
    $region42: #{label_predictor.1} parent=1 // pred_check
      _
    $region43: #{label_predictor.1} parent=1 // pred_check_branch
      %2342 = sbr.rel (0) target = $region45
    $region44: #{label_predictor.1} parent=1 // pred_region
      _
    $region45: #{label_predictor.1} parent=1 // pred_fallthru
      _
    %2343 = vsyncpa [#allocation3], 1
    %2344 = vsyncpa [#allocation5], 1

</llo_original>
